<compile_context>
chip_gen: v5e
topology: v5e:2x2
jax: 0.10.0
libtpu: 0.0.40
codegen_flags: <defaults>
</compile_context>

<pallas_src>
import functools
import math

import jax
import jax.numpy as jnp
from jax.experimental import pallas as pl
from jax.experimental.pallas import tpu as pltpu

jax.config.update("jax_default_matmul_precision", "highest")

_LN_EPS = 1e-5          # PyTorch nn.LayerNorm default
_LEAKY_SLOPE = 0.01     # F.leaky_relu default


# ---------------------------------------------------------------------------
# in-kernel math helpers
# ---------------------------------------------------------------------------
def _leaky_relu(x):
    return jnp.where(x >= 0.0, x, _LEAKY_SLOPE * x)


def _gelu_tanh(x):
    # tanh-approx GELU (matches jax.nn.gelu(approximate=True)); EUP-friendly.
    c = math.sqrt(2.0 / math.pi)
    return 0.5 * x * (1.0 + jnp.tanh(c * (x + 0.044715 * x * x * x)))


def _layernorm(x, gamma, beta):
    mu = jnp.mean(x, axis=-1, keepdims=True)
    var = jnp.mean(jnp.square(x - mu), axis=-1, keepdims=True)
    return (x - mu) * jax.lax.rsqrt(var + _LN_EPS) * gamma + beta


def _const_spec(arr):
    """Full-array block that stays resident across all grid steps."""
    nd = arr.ndim
    return pl.BlockSpec(arr.shape, lambda *_: (0,) * nd)


# ---------------------------------------------------------------------------
# Kernel 1: stem linear + LayerNorm + positional-embedding MLP + concat
# ---------------------------------------------------------------------------
def _embed_kernel(patch_ref, pos_ref, w_stem_ref, ln_g_ref, ln_b_ref,
                  w1_ref, b1_ref, w2_ref, b2_ref, w3_ref, b3_ref, out_ref):
    # stem_linear (bias=False) followed by LayerNorm over features.
    h = jnp.dot(patch_ref[...], w_stem_ref[...],
                preferred_element_type=jnp.float32)
    stem = _layernorm(h, ln_g_ref[...], ln_b_ref[...])

    # FCCNetwork: Linear(1,64)+leaky, Linear(64,64)+leaky, Linear(64,D/2).
    p = pos_ref[...]                                   # (tn, 1)
    a = _leaky_relu(p * w1_ref[...] + b1_ref[...])     # (tn,1)*(1,64) broadcast
    a = _leaky_relu(jnp.dot(a, w2_ref[...],
                            preferred_element_type=jnp.float32) + b2_ref[...])
    pe = jnp.dot(a, w3_ref[...],
                 preferred_element_type=jnp.float32) + b3_ref[...]

    # torch.cat([tokens, positional_embeddings], dim=-1)
    out_ref[...] = jnp.concatenate([stem, pe], axis=-1).astype(out_ref.dtype)


def _embed_pallas(patches, pos, params):
    N, P = patches.shape
    F2 = params["stem_w"].shape[1]
    D = 2 * F2

    # Pick the largest row tile <= 1024 that divides N (multiple of 8 when possible).
    tn = N
    for cand in (1024, 512, 256, 128, 64, 32, 16, 8):
        if N % cand == 0:
            tn = cand
            break

    weight_names = ["stem_w", "stem_ln_g", "stem_ln_b",
                    "pos_w1", "pos_b1", "pos_w2", "pos_b2", "pos_w3", "pos_b3"]
    weights = [params[n] for n in weight_names]

    return pl.pallas_call(
        _embed_kernel,
        out_shape=jax.ShapeDtypeStruct((N, D), patches.dtype),
        grid=(N // tn,),
        in_specs=[pl.BlockSpec((tn, P), lambda i: (i, 0)),
                  pl.BlockSpec((tn, 1), lambda i: (i, 0))]
                 + [_const_spec(w) for w in weights],
        out_specs=pl.BlockSpec((tn, D), lambda i: (i, 0)),
        compiler_params=pltpu.CompilerParams(
            dimension_semantics=("parallel",)),
    )(patches, pos, *weights)


# ---------------------------------------------------------------------------
# Kernel 2: one pre-norm transformer encoder layer (MHA + GELU FFN), fused
# ---------------------------------------------------------------------------
def _encoder_layer_kernel(x_ref, ln1_g_ref, ln1_b_ref,
                          wq_ref, wk_ref, wv_ref, bq_ref, bk_ref, bv_ref,
                          wo_ref, bo_ref,
                          ln2_g_ref, ln2_b_ref, w1_ref, b1_ref, w2_ref, b2_ref,
                          out_ref, *, num_heads, head_dim):
    x = x_ref[0].astype(jnp.float32)                   # (S, D) for this batch element

    # --- self-attention sublayer: x = x + MHA(LN1(x)) ---
    h = _layernorm(x, ln1_g_ref[...], ln1_b_ref[...])
    q = jnp.dot(h, wq_ref[...], preferred_element_type=jnp.float32) + bq_ref[...]
    k = jnp.dot(h, wk_ref[...], preferred_element_type=jnp.float32) + bk_ref[...]
    v = jnp.dot(h, wv_ref[...], preferred_element_type=jnp.float32) + bv_ref[...]

    scale = 1.0 / math.sqrt(head_dim)
    heads = []
    for hi in range(num_heads):                        # static, small trip count
        lo = hi * head_dim
        qh = q[:, lo:lo + head_dim] * scale
        kh = k[:, lo:lo + head_dim]
        vh = v[:, lo:lo + head_dim]
        # scores = qh @ kh^T   (contract last dims; avoids explicit transpose)
        s = jax.lax.dot_general(qh, kh, (((1,), (1,)), ((), ())),
                                preferred_element_type=jnp.float32)  # (S, S)
        s = s - jnp.max(s, axis=-1, keepdims=True)
        p = jnp.exp(s)
        p = p / jnp.sum(p, axis=-1, keepdims=True)
        heads.append(jnp.dot(p, vh, preferred_element_type=jnp.float32))
    attn = jnp.concatenate(heads, axis=-1)             # (S, D)
    attn = jnp.dot(attn, wo_ref[...],
                   preferred_element_type=jnp.float32) + bo_ref[...]
    x = x + attn

    # --- feed-forward sublayer: x = x + W2 @ gelu(W1 @ LN2(x) + b1) + b2 ---
    h2 = _layernorm(x, ln2_g_ref[...], ln2_b_ref[...])
    f = jnp.dot(h2, w1_ref[...], preferred_element_type=jnp.float32) + b1_ref[...]
    f = _gelu_tanh(f)
    f = jnp.dot(f, w2_ref[...], preferred_element_type=jnp.float32) + b2_ref[...]

    out_ref[0] = (x + f).astype(out_ref.dtype)


_LAYER_PARAM_NAMES = ["ln1_g", "ln1_b", "wq", "wk", "wv", "bq", "bk", "bv",
                      "wo", "bo", "ln2_g", "ln2_b",
                      "ffn_w1", "ffn_b1", "ffn_w2", "ffn_b2"]


def _encoder_layer_pallas(x, layer_params, num_heads):
    B, S, D = x.shape
    head_dim = D // num_heads
    weights = [layer_params[n] for n in _LAYER_PARAM_NAMES]

    kernel = functools.partial(_encoder_layer_kernel,
                               num_heads=num_heads, head_dim=head_dim)
    return pl.pallas_call(
        kernel,
        out_shape=jax.ShapeDtypeStruct((B, S, D), x.dtype),
        grid=(B,),
        in_specs=[pl.BlockSpec((1, S, D), lambda b: (b, 0, 0))]
                 + [_const_spec(w) for w in weights],
        out_specs=pl.BlockSpec((1, S, D), lambda b: (b, 0, 0)),
        compiler_params=pltpu.CompilerParams(
            dimension_semantics=("parallel",)),
    )(x, *weights)


# ---------------------------------------------------------------------------
# full forward (wrapper does only layout plumbing; compute is in kernels)
# ---------------------------------------------------------------------------
def conv2d_transformer_forward(x, params, grid_patch_size, num_heads):
    B, C, H, W = x.shape
    gp = grid_patch_size

    # F.interpolate(mode='nearest') when H/gp is not an integer (gather in wrapper).
    if H % gp != 0:
        new_h = ((H + gp - 1) // gp) * gp
        new_w = new_h
        ri = (jnp.arange(new_h) * H) // new_h
        ci = (jnp.arange(new_w) * W) // new_w
        x = x[:, :, ri][:, :, :, ci]
        H, W = new_h, new_w

    hb, wb = H // gp, W // gp
    S = hb * wb                                         # num_patches per image

    # rearrange 'b f (h h1) (w w1) -> (b h w) (h1 w1 f)'
    patches = x.reshape(B, C, hb, gp, wb, gp)
    patches = patches.transpose(0, 2, 4, 3, 5, 1)        # (b, h, w, h1, w1, f)
    patches = patches.reshape(B * S, gp * gp * C)

    # position inputs: arange(S)/S per image, batch-major rows -> (B*S, 1)
    pos = jnp.tile(jnp.arange(S, dtype=x.dtype) / S, (B,)).reshape(B * S, 1)

    tokens = _embed_pallas(patches, pos, params)         # (B*S, D)
    D = tokens.shape[-1]
    tokens = tokens.reshape(B, S, D)

    for layer_params in params["layers"]:
        tokens = _encoder_layer_pallas(tokens, layer_params, num_heads)
    return tokens


# ---------------------------------------------------------------------------
# parameter construction + pure-JAX reference
# ---------------------------------------------------------------------------
def init_params(key, channels, gp, d_model, num_layers, d_ff):
    F2 = d_model // 2
    P = gp * gp * channels
    keys = jax.random.split(key, 8 + num_layers)

    def w(k, shape, scale=0.05):
        return jax.random.normal(k, shape, dtype=jnp.float32) * scale

    params = {
        "stem_w": w(keys[0], (P, F2)),
        "stem_ln_g": jnp.ones((1, F2), jnp.float32),
        "stem_ln_b": jnp.zeros((1, F2), jnp.float32),
        "pos_w1": w(keys[1], (1, 64)),
        "pos_b1": w(keys[2], (1, 64)),
        "pos_w2": w(keys[3], (64, 64)),
        "pos_b2": w(keys[4], (1, 64)),
        "pos_w3": w(keys[5], (64, F2)),
        "pos_b3": w(keys[6], (1, F2)),
        "layers": [],
    }
    for l in range(num_layers):
        lk = jax.random.split(keys[7 + l], 12)
        params["layers"].append({
            "ln1_g": jnp.ones((1, d_model), jnp.float32),
            "ln1_b": jnp.zeros((1, d_model), jnp.float32),
            "wq": w(lk[0], (d_model, d_model)),
            "wk": w(lk[1], (d_model, d_model)),
            "wv": w(lk[2], (d_model, d_model)),
            "bq": w(lk[3], (1, d_model)),
            "bk": w(lk[4], (1, d_model)),
            "bv": w(lk[5], (1, d_model)),
            "wo": w(lk[6], (d_model, d_model)),
            "bo": w(lk[7], (1, d_model)),
            "ln2_g": jnp.ones((1, d_model), jnp.float32),
            "ln2_b": jnp.zeros((1, d_model), jnp.float32),
            "ffn_w1": w(lk[8], (d_model, d_ff)),
            "ffn_b1": w(lk[9], (1, d_ff)),
            "ffn_w2": w(lk[10], (d_ff, d_model)),
            "ffn_b2": w(lk[11], (1, d_model)),
        })
    return params


def _ln_ref(x, g, b):
    mu = jnp.mean(x, axis=-1, keepdims=True)
    var = jnp.mean(jnp.square(x - mu), axis=-1, keepdims=True)
    return (x - mu) * jax.lax.rsqrt(var + _LN_EPS) * g + b


def forward_reference(x, params, gp, num_heads):
    B, C, H, W = x.shape
    if H % gp != 0:
        new_h = ((H + gp - 1) // gp) * gp
        new_w = new_h
        ri = (jnp.arange(new_h) * H) // new_h
        ci = (jnp.arange(new_w) * W) // new_w
        x = x[:, :, ri][:, :, :, ci]
        H, W = new_h, new_w
    hb, wb = H // gp, W // gp
    S = hb * wb
    p = x.reshape(B, C, hb, gp, wb, gp).transpose(0, 2, 4, 3, 5, 1)
    p = p.reshape(B * S, gp * gp * C)

    stem = _ln_ref(p @ params["stem_w"], params["stem_ln_g"], params["stem_ln_b"])
    pos = jnp.tile(jnp.arange(S, dtype=x.dtype) / S, (B,)).reshape(B * S, 1)
    a = jnp.where(pos @ params["pos_w1"] + params["pos_b1"] >= 0,
                  pos @ params["pos_w1"] + params["pos_b1"],
                  _LEAKY_SLOPE * (pos @ params["pos_w1"] + params["pos_b1"]))
    h2 = a @ params["pos_w2"] + params["pos_b2"]
    a = jnp.where(h2 >= 0, h2, _LEAKY_SLOPE * h2)
    pe = a @ params["pos_w3"] + params["pos_b3"]

    tok = jnp.concatenate([stem, pe], axis=-1).reshape(B, S, -1)
    D = tok.shape[-1]
    hd = D // num_heads
    for lp in params["layers"]:
        h = _ln_ref(tok, lp["ln1_g"], lp["ln1_b"])
        q = (h @ lp["wq"] + lp["bq"]).reshape(B, S, num_heads, hd).transpose(0, 2, 1, 3)
        k = (h @ lp["wk"] + lp["bk"]).reshape(B, S, num_heads, hd).transpose(0, 2, 1, 3)
        v = (h @ lp["wv"] + lp["bv"]).reshape(B, S, num_heads, hd).transpose(0, 2, 1, 3)
        s = jnp.einsum("bhqd,bhkd->bhqk", q, k) / math.sqrt(hd)
        pr = jax.nn.softmax(s, axis=-1)
        o = jnp.einsum("bhqk,bhkd->bhqd", pr, v).transpose(0, 2, 1, 3).reshape(B, S, D)
        tok = tok + (o @ lp["wo"] + lp["bo"])
        hh = _ln_ref(tok, lp["ln2_g"], lp["ln2_b"])
        f = jax.nn.gelu(hh @ lp["ffn_w1"] + lp["ffn_b1"], approximate=True)
        tok = tok + (f @ lp["ffn_w2"] + lp["ffn_b2"])
    return tok


# ---------------------------------------------------------------------------
if __name__ == "__main__":
    key = jax.random.PRNGKey(0)
    B, C, H, W = 2, 4, 16, 16
    grid_patch_size = 8          # -> 2x2 = 4 patches per image
    d_model = 32                 # transformer_num_filters
    num_layers = 2               # transformer_num_layers
    num_heads = 4                # transformer_num_heads
    d_ff = 64                    # transformer_dim_feedforward

    kx, kp = jax.random.split(key)
    x = jax.random.normal(kx, (B, C, H, W), dtype=jnp.float32)
    params = init_params(kp, C, grid_patch_size, d_model, num_layers, d_ff)

    out = conv2d_transformer_forward(x, params, grid_patch_size, num_heads)
    out = jax.block_until_ready(out)

    ref = forward_reference(x, params, grid_patch_size, num_heads)
    ref = jax.block_until_ready(ref)

    S = (H // grid_patch_size) * (W // grid_patch_size)
    assert out.shape == (B, S, d_model), out.shape
    max_err = float(jnp.max(jnp.abs(out - ref)))
    assert jnp.allclose(out, ref, rtol=2e-3, atol=2e-3), f"mismatch, max abs err {max_err}"

    print("KERNEL_OK")
</pallas_src>

<mosaic_0001>
module attributes {stable_mosaic.version = 11 : i64} {
  func.func @_embed_kernel(%arg0: i32, %arg1: memref<8x256xf32, #tpu.memory_space<vmem>>, %arg2: memref<8x1xf32, #tpu.memory_space<vmem>>, %arg3: memref<256x16xf32, #tpu.memory_space<vmem>>, %arg4: memref<1x16xf32, #tpu.memory_space<vmem>>, %arg5: memref<1x16xf32, #tpu.memory_space<vmem>>, %arg6: memref<1x64xf32, #tpu.memory_space<vmem>>, %arg7: memref<1x64xf32, #tpu.memory_space<vmem>>, %arg8: memref<64x64xf32, #tpu.memory_space<vmem>>, %arg9: memref<1x64xf32, #tpu.memory_space<vmem>>, %arg10: memref<64x16xf32, #tpu.memory_space<vmem>>, %arg11: memref<1x16xf32, #tpu.memory_space<vmem>>, %arg12: memref<8x32xf32, #tpu.memory_space<vmem>>) attributes {dimension_semantics = [#tpu.dimension_semantics<parallel>], iteration_bounds = array<i64: 1>, scalar_prefetch = 0 : i64, scratch_operands = 0 : i64, tpu.core_type = #tpu.core_type<tc>, window_params = [{transform_indices = @transform_0, window_bounds = array<i64: 8, 256>}, {transform_indices = @transform_1, window_bounds = array<i64: 8, 1>}, {pipeline_mode = #tpu.pipeline_mode<synchronous>, transform_indices = @transform_2, window_bounds = array<i64: 256, 16>}, {pipeline_mode = #tpu.pipeline_mode<synchronous>, transform_indices = @transform_3, window_bounds = array<i64: 1, 16>}, {pipeline_mode = #tpu.pipeline_mode<synchronous>, transform_indices = @transform_4, window_bounds = array<i64: 1, 16>}, {pipeline_mode = #tpu.pipeline_mode<synchronous>, transform_indices = @transform_5, window_bounds = array<i64: 1, 64>}, {pipeline_mode = #tpu.pipeline_mode<synchronous>, transform_indices = @transform_6, window_bounds = array<i64: 1, 64>}, {pipeline_mode = #tpu.pipeline_mode<synchronous>, transform_indices = @transform_7, window_bounds = array<i64: 64, 64>}, {pipeline_mode = #tpu.pipeline_mode<synchronous>, transform_indices = @transform_8, window_bounds = array<i64: 1, 64>}, {pipeline_mode = #tpu.pipeline_mode<synchronous>, transform_indices = @transform_9, window_bounds = array<i64: 64, 16>}, {pipeline_mode = #tpu.pipeline_mode<synchronous>, transform_indices = @transform_10, window_bounds = array<i64: 1, 16>}, {transform_indices = @transform_11, window_bounds = array<i64: 8, 32>}]} {
    %c0 = arith.constant 0 : index
    %c0_0 = arith.constant 0 : index
    %0 = vector.load %arg1[%c0, %c0_0] : memref<8x256xf32, #tpu.memory_space<vmem>>, vector<8x256xf32>
    %c0_1 = arith.constant 0 : index
    %c0_2 = arith.constant 0 : index
    %1 = vector.load %arg3[%c0_1, %c0_2] : memref<256x16xf32, #tpu.memory_space<vmem>>, vector<256x16xf32>
    %cst = arith.constant dense<0.000000e+00> : vector<8x16xf32>
    %2 = tpu.matmul %0, %1, %cst {dimension_numbers = #tpu.dot_dimension_numbers<[1], [0], [0], [1], [0, 0, 1, 1], [], []>, precision = #tpu.contract_precision<fp32>} : vector<8x256xf32>, vector<256x16xf32>, vector<8x16xf32> -> vector<8x16xf32>
    %c0_3 = arith.constant 0 : index
    %c0_4 = arith.constant 0 : index
    %3 = vector.load %arg4[%c0_3, %c0_4] : memref<1x16xf32, #tpu.memory_space<vmem>>, vector<1x16xf32>
    %c0_5 = arith.constant 0 : index
    %c0_6 = arith.constant 0 : index
    %4 = vector.load %arg5[%c0_5, %c0_6] : memref<1x16xf32, #tpu.memory_space<vmem>>, vector<1x16xf32>
    %cst_7 = arith.constant dense<0.000000e+00> : vector<8xf32>
    %5 = vector.multi_reduction <add>, %2, %cst_7 [1] : vector<8x16xf32> to vector<8xf32>
    %6 = vector.shape_cast %5 : vector<8xf32> to vector<8x1xf32>
    %cst_8 = arith.constant 1.600000e+01 : f32
    %7 = vector.broadcast %cst_8 : f32 to vector<8x1xf32>
    %8 = arith.divf %6, %7 : vector<8x1xf32>
    %9 = vector.broadcast %8 : vector<8x1xf32> to vector<8x16xf32>
    %10 = arith.subf %2, %9 : vector<8x16xf32>
    %11 = arith.mulf %10, %10 : vector<8x16xf32>
    %cst_9 = arith.constant dense<0.000000e+00> : vector<8xf32>
    %12 = vector.multi_reduction <add>, %11, %cst_9 [1] : vector<8x16xf32> to vector<8xf32>
    %13 = vector.shape_cast %12 : vector<8xf32> to vector<8x1xf32>
    %cst_10 = arith.constant 1.600000e+01 : f32
    %14 = vector.broadcast %cst_10 : f32 to vector<8x1xf32>
    %15 = arith.divf %13, %14 : vector<8x1xf32>
    %16 = vector.broadcast %8 : vector<8x1xf32> to vector<8x16xf32>
    %17 = arith.subf %2, %16 : vector<8x16xf32>
    %cst_11 = arith.constant 9.99999974E-6 : f32
    %18 = vector.broadcast %cst_11 : f32 to vector<8x1xf32>
    %19 = arith.addf %15, %18 : vector<8x1xf32>
    %20 = math.rsqrt %19 : vector<8x1xf32>
    %21 = vector.broadcast %20 : vector<8x1xf32> to vector<8x16xf32>
    %22 = arith.mulf %17, %21 : vector<8x16xf32>
    %23 = vector.broadcast %3 : vector<1x16xf32> to vector<8x16xf32>
    %24 = arith.mulf %22, %23 : vector<8x16xf32>
    %25 = vector.broadcast %4 : vector<1x16xf32> to vector<8x16xf32>
    %26 = arith.addf %24, %25 : vector<8x16xf32>
    %c0_12 = arith.constant 0 : index
    %c0_13 = arith.constant 0 : index
    %27 = vector.load %arg2[%c0_12, %c0_13] : memref<8x1xf32, #tpu.memory_space<vmem>>, vector<8x1xf32>
    %c0_14 = arith.constant 0 : index
    %c0_15 = arith.constant 0 : index
    %28 = vector.load %arg6[%c0_14, %c0_15] : memref<1x64xf32, #tpu.memory_space<vmem>>, vector<1x64xf32>
    %29 = vector.broadcast %27 : vector<8x1xf32> to vector<8x64xf32>
    %30 = vector.broadcast %28 : vector<1x64xf32> to vector<8x64xf32>
    %31 = arith.mulf %29, %30 : vector<8x64xf32>
    %c0_16 = arith.constant 0 : index
    %c0_17 = arith.constant 0 : index
    %32 = vector.load %arg7[%c0_16, %c0_17] : memref<1x64xf32, #tpu.memory_space<vmem>>, vector<1x64xf32>
    %33 = vector.broadcast %32 : vector<1x64xf32> to vector<8x64xf32>
    %34 = arith.addf %31, %33 : vector<8x64xf32>
    %cst_18 = arith.constant 0.000000e+00 : f32
    %35 = vector.broadcast %cst_18 : f32 to vector<8x64xf32>
    %36 = arith.cmpf oge, %34, %35 : vector<8x64xf32>
    %cst_19 = arith.constant 0.00999999977 : f32
    %37 = vector.broadcast %cst_19 : f32 to vector<8x64xf32>
    %38 = arith.mulf %37, %34 : vector<8x64xf32>
    %39 = arith.select %36, %34, %38 : vector<8x64xi1>, vector<8x64xf32>
    %c0_20 = arith.constant 0 : index
    %c0_21 = arith.constant 0 : index
    %40 = vector.load %arg8[%c0_20, %c0_21] : memref<64x64xf32, #tpu.memory_space<vmem>>, vector<64x64xf32>
    %cst_22 = arith.constant dense<0.000000e+00> : vector<8x64xf32>
    %41 = tpu.matmul %39, %40, %cst_22 {dimension_numbers = #tpu.dot_dimension_numbers<[1], [0], [0], [1], [0, 0, 1, 1], [], []>, precision = #tpu.contract_precision<fp32>} : vector<8x64xf32>, vector<64x64xf32>, vector<8x64xf32> -> vector<8x64xf32>
    %c0_23 = arith.constant 0 : index
    %c0_24 = arith.constant 0 : index
    %42 = vector.load %arg9[%c0_23, %c0_24] : memref<1x64xf32, #tpu.memory_space<vmem>>, vector<1x64xf32>
    %43 = vector.broadcast %42 : vector<1x64xf32> to vector<8x64xf32>
    %44 = arith.addf %41, %43 : vector<8x64xf32>
    %cst_25 = arith.constant 0.000000e+00 : f32
    %45 = vector.broadcast %cst_25 : f32 to vector<8x64xf32>
    %46 = arith.cmpf oge, %44, %45 : vector<8x64xf32>
    %cst_26 = arith.constant 0.00999999977 : f32
    %47 = vector.broadcast %cst_26 : f32 to vector<8x64xf32>
    %48 = arith.mulf %47, %44 : vector<8x64xf32>
    %49 = arith.select %46, %44, %48 : vector<8x64xi1>, vector<8x64xf32>
    %c0_27 = arith.constant 0 : index
    %c0_28 = arith.constant 0 : index
    %50 = vector.load %arg10[%c0_27, %c0_28] : memref<64x16xf32, #tpu.memory_space<vmem>>, vector<64x16xf32>
    %cst_29 = arith.constant dense<0.000000e+00> : vector<8x16xf32>
    %51 = tpu.matmul %49, %50, %cst_29 {dimension_numbers = #tpu.dot_dimension_numbers<[1], [0], [0], [1], [0, 0, 1, 1], [], []>, precision = #tpu.contract_precision<fp32>} : vector<8x64xf32>, vector<64x16xf32>, vector<8x16xf32> -> vector<8x16xf32>
    %c0_30 = arith.constant 0 : index
    %c0_31 = arith.constant 0 : index
    %52 = vector.load %arg11[%c0_30, %c0_31] : memref<1x16xf32, #tpu.memory_space<vmem>>, vector<1x16xf32>
    %53 = vector.broadcast %52 : vector<1x16xf32> to vector<8x16xf32>
    %54 = arith.addf %51, %53 : vector<8x16xf32>
    %55 = tpu.concatenate %26, %54 in 1 : vector<8x16xf32>, vector<8x16xf32> -> vector<8x32xf32>
    %c0_32 = arith.constant 0 : index
    %c0_33 = arith.constant 0 : index
    %56 = vector.load %arg12[%c0_32, %c0_33] : memref<8x32xf32, #tpu.memory_space<vmem>>, vector<8x32xf32>
    tpu.vector_store %arg12[%c0_32, %c0_33], %55 {strides = array<i32>} : memref<8x32xf32, #tpu.memory_space<vmem>>, vector<8x32xf32>,
    return
  }
  func.func @transform_0(%arg0: i32) -> (i32, i32) {
    %c0_i32 = arith.constant 0 : i32
    %c0_i32_0 = arith.constant 0 : i32
    return %arg0, %c0_i32 : i32, i32
  }
  func.func @transform_1(%arg0: i32) -> (i32, i32) {
    %c0_i32 = arith.constant 0 : i32
    %c0_i32_0 = arith.constant 0 : i32
    return %arg0, %c0_i32 : i32, i32
  }
  func.func @transform_2(%arg0: i32) -> (i32, i32) {
    %c0_i32 = arith.constant 0 : i32
    %c0_i32_0 = arith.constant 0 : i32
    %c0_i32_1 = arith.constant 0 : i32
    return %c0_i32, %c0_i32_0 : i32, i32
  }
  func.func @transform_3(%arg0: i32) -> (i32, i32) {
    %c0_i32 = arith.constant 0 : i32
    %c0_i32_0 = arith.constant 0 : i32
    %c0_i32_1 = arith.constant 0 : i32
    return %c0_i32, %c0_i32_0 : i32, i32
  }
  func.func @transform_4(%arg0: i32) -> (i32, i32) {
    %c0_i32 = arith.constant 0 : i32
    %c0_i32_0 = arith.constant 0 : i32
    %c0_i32_1 = arith.constant 0 : i32
    return %c0_i32, %c0_i32_0 : i32, i32
  }
  func.func @transform_5(%arg0: i32) -> (i32, i32) {
    %c0_i32 = arith.constant 0 : i32
    %c0_i32_0 = arith.constant 0 : i32
    %c0_i32_1 = arith.constant 0 : i32
    return %c0_i32, %c0_i32_0 : i32, i32
  }
  func.func @transform_6(%arg0: i32) -> (i32, i32) {
    %c0_i32 = arith.constant 0 : i32
    %c0_i32_0 = arith.constant 0 : i32
    %c0_i32_1 = arith.constant 0 : i32
    return %c0_i32, %c0_i32_0 : i32, i32
  }
  func.func @transform_7(%arg0: i32) -> (i32, i32) {
    %c0_i32 = arith.constant 0 : i32
    %c0_i32_0 = arith.constant 0 : i32
    %c0_i32_1 = arith.constant 0 : i32
    return %c0_i32, %c0_i32_0 : i32, i32
  }
  func.func @transform_8(%arg0: i32) -> (i32, i32) {
    %c0_i32 = arith.constant 0 : i32
    %c0_i32_0 = arith.constant 0 : i32
    %c0_i32_1 = arith.constant 0 : i32
    return %c0_i32, %c0_i32_0 : i32, i32
  }
  func.func @transform_9(%arg0: i32) -> (i32, i32) {
    %c0_i32 = arith.constant 0 : i32
    %c0_i32_0 = arith.constant 0 : i32
    %c0_i32_1 = arith.constant 0 : i32
    return %c0_i32, %c0_i32_0 : i32, i32
  }
  func.func @transform_10(%arg0: i32) -> (i32, i32) {
    %c0_i32 = arith.constant 0 : i32
    %c0_i32_0 = arith.constant 0 : i32
    %c0_i32_1 = arith.constant 0 : i32
    return %c0_i32, %c0_i32_0 : i32, i32
  }
  func.func @transform_11(%arg0: i32) -> (i32, i32) {
    %c0_i32 = arith.constant 0 : i32
    %c0_i32_0 = arith.constant 0 : i32
    return %arg0, %c0_i32 : i32, i32
  }
}

</mosaic_0001>

<llo_original>
// kernel: tpu_custom_call.1
$region0: #{tpu_custom_call.1}
  #allocation0 [shape = 'u32[]', space=smem, size = 0x4, offset = 0x4, fixed_abs, tag = 'smem constant byte address 0x4 - core index']
  #allocation1 [shape = 'u32[72,128]{1,0:T(1,128)}', space=vmem, size = 0x9000, scoped, tag = 'internal scratch']
  %s0 = inlined_call_operand.vmem [shape: f32[8,256], index: 0, kind: input, shape index: {}]
  %s1 = inlined_call_operand.vmem [shape: f32[8,1], index: 1, kind: input, shape index: {}]
  %s2 = inlined_call_operand.vmem [shape: f32[256,16], index: 2, kind: input, shape index: {}]
  %s3 = inlined_call_operand.vmem [shape: f32[1,16], index: 3, kind: input, shape index: {}]
  %s4 = inlined_call_operand.vmem [shape: f32[1,16], index: 4, kind: input, shape index: {}]
  %s5 = inlined_call_operand.vmem [shape: f32[1,64], index: 5, kind: input, shape index: {}]
  %s6 = inlined_call_operand.vmem [shape: f32[1,64], index: 6, kind: input, shape index: {}]
  %s7 = inlined_call_operand.vmem [shape: f32[64,64], index: 7, kind: input, shape index: {}]
  %s8 = inlined_call_operand.vmem [shape: f32[1,64], index: 8, kind: input, shape index: {}]
  %s9 = inlined_call_operand.vmem [shape: f32[64,16], index: 9, kind: input, shape index: {}]
  %s10 = inlined_call_operand.vmem [shape: f32[1,16], index: 10, kind: input, shape index: {}]
  %s11 = inlined_call_operand.hbm [shape: f32[8,32], index: 11, kind: output, shape index: {}]
  %s12 = sld [smem:[#allocation0]]
  $region54: #{tpu_custom_call.1} parent=0
    _
  %s14 = ssub.s32 1, %s12
  %s15 = scalar_select 0, %s14, %s12
  $region1: #{tpu_custom_call.1} parent=0
    #allocation2 [shape = 'u8[4096]{0}', space=vmem, size = 0x1000, scoped, tag = 'output window, operand 0, single buffered']
    #allocation3 [shape = 's32[1]{0}', space=sflag, size = 0x4, scoped, tag = 'scoped memory for tpu_custom_call.1']
    %16 = vsyncpa [#allocation3], 0
    // Predicated region
    $region2: #{tpu_custom_call.1} parent=1 // pred_check
      _
    $region3: #{tpu_custom_call.1} parent=1 // pred_check_branch
      %18 = sbr.rel (0) target = $region5
    $region4: #{tpu_custom_call.1} parent=1 // pred_region
      _
    $region5: #{tpu_custom_call.1} parent=1 // pred_fallthru
      _
    // Predicated region
    $region6: #{tpu_custom_call.1} parent=1 // pred_check
      _
    $region7: #{tpu_custom_call.1} parent=1 // pred_check_branch
      %20 = sbr.rel (0) target = $region9
    $region8: #{tpu_custom_call.1} parent=1 // pred_region
      _
    $region9: #{tpu_custom_call.1} parent=1 // pred_fallthru
      _
    // Predicated region
    $region10: #{tpu_custom_call.1} parent=1 // pred_check
      _
    $region11: #{tpu_custom_call.1} parent=1 // pred_check_branch
      %22 = sbr.rel (0) target = $region13
    $region12: #{tpu_custom_call.1} parent=1 // pred_region
      _
    $region13: #{tpu_custom_call.1} parent=1 // pred_fallthru
      _
    // Predicated region
    $region14: #{tpu_custom_call.1} parent=1 // pred_check
      _
    $region15: #{tpu_custom_call.1} parent=1 // pred_check_branch
      %24 = sbr.rel (0) target = $region17
    $region16: #{tpu_custom_call.1} parent=1 // pred_region
      _
    $region17: #{tpu_custom_call.1} parent=1 // pred_fallthru
      _
    // Predicated region
    $region18: #{tpu_custom_call.1} parent=1 // pred_check
      _
    $region19: #{tpu_custom_call.1} parent=1 // pred_check_branch
      %26 = sbr.rel (0) target = $region21
    $region20: #{tpu_custom_call.1} parent=1 // pred_region
      _
    $region21: #{tpu_custom_call.1} parent=1 // pred_fallthru
      _
    // Predicated region
    $region22: #{tpu_custom_call.1} parent=1 // pred_check
      _
    $region23: #{tpu_custom_call.1} parent=1 // pred_check_branch
      %28 = sbr.rel (0) target = $region25
    $region24: #{tpu_custom_call.1} parent=1 // pred_region
      _
    $region25: #{tpu_custom_call.1} parent=1 // pred_fallthru
      _
    // Predicated region
    $region26: #{tpu_custom_call.1} parent=1 // pred_check
      _
    $region27: #{tpu_custom_call.1} parent=1 // pred_check_branch
      %30 = sbr.rel (0) target = $region29
    $region28: #{tpu_custom_call.1} parent=1 // pred_region
      _
    $region29: #{tpu_custom_call.1} parent=1 // pred_fallthru
      _
    // Predicated region
    $region30: #{tpu_custom_call.1} parent=1 // pred_check
      _
    $region31: #{tpu_custom_call.1} parent=1 // pred_check_branch
      %32 = sbr.rel (0) target = $region33
    $region32: #{tpu_custom_call.1} parent=1 // pred_region
      _
    $region33: #{tpu_custom_call.1} parent=1 // pred_fallthru
      _
    // Predicated region
    $region34: #{tpu_custom_call.1} parent=1 // pred_check
      _
    $region35: #{tpu_custom_call.1} parent=1 // pred_check_branch
      %34 = sbr.rel (0) target = $region37
    $region36: #{tpu_custom_call.1} parent=1 // pred_region
      _
    $region37: #{tpu_custom_call.1} parent=1 // pred_fallthru
      _
    // Predicated region
    $region38: #{tpu_custom_call.1} parent=1 // pred_check
      _
    $region39: #{tpu_custom_call.1} parent=1 // pred_check_branch
      %36 = sbr.rel (0) target = $region41
    $region40: #{tpu_custom_call.1} parent=1 // pred_region
      _
    $region41: #{tpu_custom_call.1} parent=1 // pred_fallthru
      _
    // Predicated region
    $region42: #{tpu_custom_call.1} parent=1 // pred_check
      _
    $region43: #{tpu_custom_call.1} parent=1 // pred_check_branch
      %38 = sbr.rel (0) target = $region45
    $region44: #{tpu_custom_call.1} parent=1 // pred_region
      _
    $region45: #{tpu_custom_call.1} parent=1 // pred_fallthru
      _
    %v39 = vld [vmem:[%s0] sm:$0xff]
    %v40 = vld [vmem:[%s0 + $0x8] sm:$0xff]
    %v41 = vld [vmem:[%s2] sm:$0xff]
    %v42 = vld [vmem:[%s2 + $0x8] sm:$0xff]
    %v43 = vld [vmem:[%s2 + $0x10] sm:$0xff]
    %v44 = vld [vmem:[%s2 + $0x18] sm:$0xff]
    %v45 = vld [vmem:[%s2 + $0x20] sm:$0xff]
    %v46 = vld [vmem:[%s2 + $0x28] sm:$0xff]
    %v47 = vld [vmem:[%s2 + $0x30] sm:$0xff]
    %v48 = vld [vmem:[%s2 + $0x38] sm:$0xff]
    %v49 = vld [vmem:[%s2 + $0x40] sm:$0xff]
    %v50 = vld [vmem:[%s2 + $0x48] sm:$0xff]
    %v51 = vld [vmem:[%s2 + $0x50] sm:$0xff]
    %v52 = vld [vmem:[%s2 + $0x58] sm:$0xff]
    %v53 = vld [vmem:[%s2 + $0x60] sm:$0xff]
    %v54 = vld [vmem:[%s2 + $0x68] sm:$0xff]
    %v55 = vld [vmem:[%s2 + $0x70] sm:$0xff]
    %v56 = vld [vmem:[%s2 + $0x78] sm:$0xff]
    %v57 = vld [vmem:[%s2 + $0x80] sm:$0xff]
    %v58 = vld [vmem:[%s2 + $0x88] sm:$0xff]
    %v59 = vld [vmem:[%s2 + $0x90] sm:$0xff]
    %v60 = vld [vmem:[%s2 + $0x98] sm:$0xff]
    %v61 = vld [vmem:[%s2 + $0xa0] sm:$0xff]
    %v62 = vld [vmem:[%s2 + $0xa8] sm:$0xff]
    %v63 = vld [vmem:[%s2 + $0xb0] sm:$0xff]
    %v64 = vld [vmem:[%s2 + $0xb8] sm:$0xff]
    %v65 = vld [vmem:[%s2 + $0xc0] sm:$0xff]
    %v66 = vld [vmem:[%s2 + $0xc8] sm:$0xff]
    %v67 = vld [vmem:[%s2 + $0xd0] sm:$0xff]
    %v68 = vld [vmem:[%s2 + $0xd8] sm:$0xff]
    %v69 = vld [vmem:[%s2 + $0xe0] sm:$0xff]
    %v70 = vld [vmem:[%s2 + $0xe8] sm:$0xff]
    %v71 = vld [vmem:[%s2 + $0xf0] sm:$0xff]
    %v72 = vld [vmem:[%s2 + $0xf8] sm:$0xff]
    %v73 = vand.u32 %v56, 4294901760
    %74 = vmatpush.msra.mxu0 %v73
    %v75 = vand.u32 %v55, 4294901760
    %76 = vmatpush.msra.mxu0 %v75
    %v77 = vand.u32 %v54, 4294901760
    %78 = vmatpush.msra.mxu0 %v77
    %v79 = vand.u32 %v53, 4294901760
    %80 = vmatpush.msra.mxu0 %v79
    %v81 = vand.u32 %v52, 4294901760
    %82 = vmatpush.msra.mxu0 %v81
    %v83 = vand.u32 %v51, 4294901760
    %84 = vmatpush.msra.mxu0 %v83
    %v85 = vand.u32 %v50, 4294901760
    %86 = vmatpush.msra.mxu0 %v85
    %v87 = vand.u32 %v49, 4294901760
    %88 = vmatpush.msra.mxu0 %v87
    %v89 = vand.u32 %v48, 4294901760
    %90 = vmatpush.msra.mxu0 %v89
    %v91 = vand.u32 %v47, 4294901760
    %92 = vmatpush.msra.mxu0 %v91
    %v93 = vand.u32 %v46, 4294901760
    %94 = vmatpush.msra.mxu0 %v93
    %v95 = vand.u32 %v45, 4294901760
    %96 = vmatpush.msra.mxu0 %v95
    %v97 = vand.u32 %v44, 4294901760
    %98 = vmatpush.msra.mxu0 %v97
    %v99 = vand.u32 %v43, 4294901760
    %100 = vmatpush.msra.mxu0 %v99
    %v101 = vand.u32 %v42, 4294901760
    %102 = vmatpush.msra.mxu0 %v101
    %v103 = vand.u32 %v41, 4294901760
    %104 = vmatpush.msra.mxu0 %v103
    %v105 = vand.u32 %v39, 4294901760
    %v106 = vsub.f32 %v39, %v105
    %v107 = vand.u32 %v106, 4294901760
    %v108 = vsub.f32 %v106, %v107
    %v109 = vand.u32 %v108, 4294901760
    %110 = vmatmul.f32.gmra.mxu0 %v109
    %v111 = vpop.f32.mrf.mxu0
    %v112 = vadd.f32 0.0, %v111
    %113 = vdwg.mxu0
    %v114 = vand.u32 %v56, 4294901760
    %v115 = vsub.f32 %v56, %v114
    %v116 = vand.u32 %v115, 4294901760
    %v117 = vsub.f32 %v115, %v116
    %v118 = vand.u32 %v117, 4294901760
    %119 = vmatpush.msra.mxu0 %v118
    %v120 = vand.u32 %v55, 4294901760
    %v121 = vsub.f32 %v55, %v120
    %v122 = vand.u32 %v121, 4294901760
    %v123 = vsub.f32 %v121, %v122
    %v124 = vand.u32 %v123, 4294901760
    %125 = vmatpush.msra.mxu0 %v124
    %v126 = vand.u32 %v54, 4294901760
    %v127 = vsub.f32 %v54, %v126
    %v128 = vand.u32 %v127, 4294901760
    %v129 = vsub.f32 %v127, %v128
    %v130 = vand.u32 %v129, 4294901760
    %131 = vmatpush.msra.mxu0 %v130
    %v132 = vand.u32 %v53, 4294901760
    %v133 = vsub.f32 %v53, %v132
    %v134 = vand.u32 %v133, 4294901760
    %v135 = vsub.f32 %v133, %v134
    %v136 = vand.u32 %v135, 4294901760
    %137 = vmatpush.msra.mxu0 %v136
    %v138 = vand.u32 %v52, 4294901760
    %v139 = vsub.f32 %v52, %v138
    %v140 = vand.u32 %v139, 4294901760
    %v141 = vsub.f32 %v139, %v140
    %v142 = vand.u32 %v141, 4294901760
    %143 = vmatpush.msra.mxu0 %v142
    %v144 = vand.u32 %v51, 4294901760
    %v145 = vsub.f32 %v51, %v144
    %v146 = vand.u32 %v145, 4294901760
    %v147 = vsub.f32 %v145, %v146
    %v148 = vand.u32 %v147, 4294901760
    %149 = vmatpush.msra.mxu0 %v148
    %v150 = vand.u32 %v50, 4294901760
    %v151 = vsub.f32 %v50, %v150
    %v152 = vand.u32 %v151, 4294901760
    %v153 = vsub.f32 %v151, %v152
    %v154 = vand.u32 %v153, 4294901760
    %155 = vmatpush.msra.mxu0 %v154
    %v156 = vand.u32 %v49, 4294901760
    %v157 = vsub.f32 %v49, %v156
    %v158 = vand.u32 %v157, 4294901760
    %v159 = vsub.f32 %v157, %v158
    %v160 = vand.u32 %v159, 4294901760
    %161 = vmatpush.msra.mxu0 %v160
    %v162 = vand.u32 %v48, 4294901760
    %v163 = vsub.f32 %v48, %v162
    %v164 = vand.u32 %v163, 4294901760
    %v165 = vsub.f32 %v163, %v164
    %v166 = vand.u32 %v165, 4294901760
    %167 = vmatpush.msra.mxu0 %v166
    %v168 = vand.u32 %v47, 4294901760
    %v169 = vsub.f32 %v47, %v168
    %v170 = vand.u32 %v169, 4294901760
    %v171 = vsub.f32 %v169, %v170
    %v172 = vand.u32 %v171, 4294901760
    %173 = vmatpush.msra.mxu0 %v172
    %v174 = vand.u32 %v46, 4294901760
    %v175 = vsub.f32 %v46, %v174
    %v176 = vand.u32 %v175, 4294901760
    %v177 = vsub.f32 %v175, %v176
    %v178 = vand.u32 %v177, 4294901760
    %179 = vmatpush.msra.mxu0 %v178
    %v180 = vand.u32 %v45, 4294901760
    %v181 = vsub.f32 %v45, %v180
    %v182 = vand.u32 %v181, 4294901760
    %v183 = vsub.f32 %v181, %v182
    %v184 = vand.u32 %v183, 4294901760
    %185 = vmatpush.msra.mxu0 %v184
    %v186 = vand.u32 %v44, 4294901760
    %v187 = vsub.f32 %v44, %v186
    %v188 = vand.u32 %v187, 4294901760
    %v189 = vsub.f32 %v187, %v188
    %v190 = vand.u32 %v189, 4294901760
    %191 = vmatpush.msra.mxu0 %v190
    %v192 = vand.u32 %v43, 4294901760
    %v193 = vsub.f32 %v43, %v192
    %v194 = vand.u32 %v193, 4294901760
    %v195 = vsub.f32 %v193, %v194
    %v196 = vand.u32 %v195, 4294901760
    %197 = vmatpush.msra.mxu0 %v196
    %v198 = vand.u32 %v42, 4294901760
    %v199 = vsub.f32 %v42, %v198
    %v200 = vand.u32 %v199, 4294901760
    %v201 = vsub.f32 %v199, %v200
    %v202 = vand.u32 %v201, 4294901760
    %203 = vmatpush.msra.mxu0 %v202
    %v204 = vand.u32 %v41, 4294901760
    %v205 = vsub.f32 %v41, %v204
    %v206 = vand.u32 %v205, 4294901760
    %v207 = vsub.f32 %v205, %v206
    %v208 = vand.u32 %v207, 4294901760
    %209 = vmatpush.msra.mxu0 %v208
    %v210 = vand.u32 %v39, 4294901760
    %211 = vmatmul.f32.gmra.mxu0 %v210
    %v212 = vpop.f32.mrf.mxu0
    %v213 = vadd.f32 %v112, %v212
    %214 = vdwg.mxu0
    %v215 = vand.u32 %v56, 4294901760
    %v216 = vsub.f32 %v56, %v215
    %217 = vmatpush.msra.mxu0 %v216
    %v218 = vand.u32 %v55, 4294901760
    %v219 = vsub.f32 %v55, %v218
    %220 = vmatpush.msra.mxu0 %v219
    %v221 = vand.u32 %v54, 4294901760
    %v222 = vsub.f32 %v54, %v221
    %223 = vmatpush.msra.mxu0 %v222
    %v224 = vand.u32 %v53, 4294901760
    %v225 = vsub.f32 %v53, %v224
    %226 = vmatpush.msra.mxu0 %v225
    %v227 = vand.u32 %v52, 4294901760
    %v228 = vsub.f32 %v52, %v227
    %229 = vmatpush.msra.mxu0 %v228
    %v230 = vand.u32 %v51, 4294901760
    %v231 = vsub.f32 %v51, %v230
    %232 = vmatpush.msra.mxu0 %v231
    %v233 = vand.u32 %v50, 4294901760
    %v234 = vsub.f32 %v50, %v233
    %235 = vmatpush.msra.mxu0 %v234
    %v236 = vand.u32 %v49, 4294901760
    %v237 = vsub.f32 %v49, %v236
    %238 = vmatpush.msra.mxu0 %v237
    %v239 = vand.u32 %v48, 4294901760
    %v240 = vsub.f32 %v48, %v239
    %241 = vmatpush.msra.mxu0 %v240
    %v242 = vand.u32 %v47, 4294901760
    %v243 = vsub.f32 %v47, %v242
    %244 = vmatpush.msra.mxu0 %v243
    %v245 = vand.u32 %v46, 4294901760
    %v246 = vsub.f32 %v46, %v245
    %247 = vmatpush.msra.mxu0 %v246
    %v248 = vand.u32 %v45, 4294901760
    %v249 = vsub.f32 %v45, %v248
    %250 = vmatpush.msra.mxu0 %v249
    %v251 = vand.u32 %v44, 4294901760
    %v252 = vsub.f32 %v44, %v251
    %253 = vmatpush.msra.mxu0 %v252
    %v254 = vand.u32 %v43, 4294901760
    %v255 = vsub.f32 %v43, %v254
    %256 = vmatpush.msra.mxu0 %v255
    %v257 = vand.u32 %v42, 4294901760
    %v258 = vsub.f32 %v42, %v257
    %259 = vmatpush.msra.mxu0 %v258
    %v260 = vand.u32 %v41, 4294901760
    %v261 = vsub.f32 %v41, %v260
    %262 = vmatpush.msra.mxu0 %v261
    %v263 = vand.u32 %v39, 4294901760
    %v264 = vsub.f32 %v39, %v263
    %265 = vmatmul.f32.gmra.mxu0 %v264
    %v266 = vpop.f32.mrf.mxu0
    %v267 = vadd.f32 %v213, %v266
    %268 = vdwg.mxu0
    %v269 = vand.u32 %v56, 4294901760
    %270 = vmatpush.msra.mxu0 %v269
    %v271 = vand.u32 %v55, 4294901760
    %272 = vmatpush.msra.mxu0 %v271
    %v273 = vand.u32 %v54, 4294901760
    %274 = vmatpush.msra.mxu0 %v273
    %v275 = vand.u32 %v53, 4294901760
    %276 = vmatpush.msra.mxu0 %v275
    %v277 = vand.u32 %v52, 4294901760
    %278 = vmatpush.msra.mxu0 %v277
    %v279 = vand.u32 %v51, 4294901760
    %280 = vmatpush.msra.mxu0 %v279
    %v281 = vand.u32 %v50, 4294901760
    %282 = vmatpush.msra.mxu0 %v281
    %v283 = vand.u32 %v49, 4294901760
    %284 = vmatpush.msra.mxu0 %v283
    %v285 = vand.u32 %v48, 4294901760
    %286 = vmatpush.msra.mxu0 %v285
    %v287 = vand.u32 %v47, 4294901760
    %288 = vmatpush.msra.mxu0 %v287
    %v289 = vand.u32 %v46, 4294901760
    %290 = vmatpush.msra.mxu0 %v289
    %v291 = vand.u32 %v45, 4294901760
    %292 = vmatpush.msra.mxu0 %v291
    %v293 = vand.u32 %v44, 4294901760
    %294 = vmatpush.msra.mxu0 %v293
    %v295 = vand.u32 %v43, 4294901760
    %296 = vmatpush.msra.mxu0 %v295
    %v297 = vand.u32 %v42, 4294901760
    %298 = vmatpush.msra.mxu0 %v297
    %v299 = vand.u32 %v41, 4294901760
    %300 = vmatpush.msra.mxu0 %v299
    %v301 = vand.u32 %v39, 4294901760
    %v302 = vsub.f32 %v39, %v301
    %v303 = vand.u32 %v302, 4294901760
    %304 = vmatmul.f32.gmra.mxu0 %v303
    %v305 = vpop.f32.mrf.mxu0
    %v306 = vadd.f32 %v267, %v305
    %307 = vdwg.mxu0
    %v308 = vand.u32 %v56, 4294901760
    %v309 = vsub.f32 %v56, %v308
    %v310 = vand.u32 %v309, 4294901760
    %311 = vmatpush.msra.mxu0 %v310
    %v312 = vand.u32 %v55, 4294901760
    %v313 = vsub.f32 %v55, %v312
    %v314 = vand.u32 %v313, 4294901760
    %315 = vmatpush.msra.mxu0 %v314
    %v316 = vand.u32 %v54, 4294901760
    %v317 = vsub.f32 %v54, %v316
    %v318 = vand.u32 %v317, 4294901760
    %319 = vmatpush.msra.mxu0 %v318
    %v320 = vand.u32 %v53, 4294901760
    %v321 = vsub.f32 %v53, %v320
    %v322 = vand.u32 %v321, 4294901760
    %323 = vmatpush.msra.mxu0 %v322
    %v324 = vand.u32 %v52, 4294901760
    %v325 = vsub.f32 %v52, %v324
    %v326 = vand.u32 %v325, 4294901760
    %327 = vmatpush.msra.mxu0 %v326
    %v328 = vand.u32 %v51, 4294901760
    %v329 = vsub.f32 %v51, %v328
    %v330 = vand.u32 %v329, 4294901760
    %331 = vmatpush.msra.mxu0 %v330
    %v332 = vand.u32 %v50, 4294901760
    %v333 = vsub.f32 %v50, %v332
    %v334 = vand.u32 %v333, 4294901760
    %335 = vmatpush.msra.mxu0 %v334
    %v336 = vand.u32 %v49, 4294901760
    %v337 = vsub.f32 %v49, %v336
    %v338 = vand.u32 %v337, 4294901760
    %339 = vmatpush.msra.mxu0 %v338
    %v340 = vand.u32 %v48, 4294901760
    %v341 = vsub.f32 %v48, %v340
    %v342 = vand.u32 %v341, 4294901760
    %343 = vmatpush.msra.mxu0 %v342
    %v344 = vand.u32 %v47, 4294901760
    %v345 = vsub.f32 %v47, %v344
    %v346 = vand.u32 %v345, 4294901760
    %347 = vmatpush.msra.mxu0 %v346
    %v348 = vand.u32 %v46, 4294901760
    %v349 = vsub.f32 %v46, %v348
    %v350 = vand.u32 %v349, 4294901760
    %351 = vmatpush.msra.mxu0 %v350
    %v352 = vand.u32 %v45, 4294901760
    %v353 = vsub.f32 %v45, %v352
    %v354 = vand.u32 %v353, 4294901760
    %355 = vmatpush.msra.mxu0 %v354
    %v356 = vand.u32 %v44, 4294901760
    %v357 = vsub.f32 %v44, %v356
    %v358 = vand.u32 %v357, 4294901760
    %359 = vmatpush.msra.mxu0 %v358
    %v360 = vand.u32 %v43, 4294901760
    %v361 = vsub.f32 %v43, %v360
    %v362 = vand.u32 %v361, 4294901760
    %363 = vmatpush.msra.mxu0 %v362
    %v364 = vand.u32 %v42, 4294901760
    %v365 = vsub.f32 %v42, %v364
    %v366 = vand.u32 %v365, 4294901760
    %367 = vmatpush.msra.mxu0 %v366
    %v368 = vand.u32 %v41, 4294901760
    %v369 = vsub.f32 %v41, %v368
    %v370 = vand.u32 %v369, 4294901760
    %371 = vmatpush.msra.mxu0 %v370
    %v372 = vand.u32 %v39, 4294901760
    %373 = vmatmul.f32.gmra.mxu0 %v372
    %v374 = vpop.f32.mrf.mxu0
    %v375 = vadd.f32 %v306, %v374
    %376 = vdwg.mxu0
    %v377 = vand.u32 %v56, 4294901760
    %378 = vmatpush.msra.mxu0 %v377
    %v379 = vand.u32 %v55, 4294901760
    %380 = vmatpush.msra.mxu0 %v379
    %v381 = vand.u32 %v54, 4294901760
    %382 = vmatpush.msra.mxu0 %v381
    %v383 = vand.u32 %v53, 4294901760
    %384 = vmatpush.msra.mxu0 %v383
    %v385 = vand.u32 %v52, 4294901760
    %386 = vmatpush.msra.mxu0 %v385
    %v387 = vand.u32 %v51, 4294901760
    %388 = vmatpush.msra.mxu0 %v387
    %v389 = vand.u32 %v50, 4294901760
    %390 = vmatpush.msra.mxu0 %v389
    %v391 = vand.u32 %v49, 4294901760
    %392 = vmatpush.msra.mxu0 %v391
    %v393 = vand.u32 %v48, 4294901760
    %394 = vmatpush.msra.mxu0 %v393
    %v395 = vand.u32 %v47, 4294901760
    %396 = vmatpush.msra.mxu0 %v395
    %v397 = vand.u32 %v46, 4294901760
    %398 = vmatpush.msra.mxu0 %v397
    %v399 = vand.u32 %v45, 4294901760
    %400 = vmatpush.msra.mxu0 %v399
    %v401 = vand.u32 %v44, 4294901760
    %402 = vmatpush.msra.mxu0 %v401
    %v403 = vand.u32 %v43, 4294901760
    %404 = vmatpush.msra.mxu0 %v403
    %v405 = vand.u32 %v42, 4294901760
    %406 = vmatpush.msra.mxu0 %v405
    %v407 = vand.u32 %v41, 4294901760
    %408 = vmatpush.msra.mxu0 %v407
    %v409 = vand.u32 %v39, 4294901760
    %410 = vmatmul.f32.gmra.mxu0 %v409
    %v411 = vpop.f32.mrf.mxu0
    %v412 = vadd.f32 %v375, %v411
    %413 = vdwg.mxu0
    %v414 = vand.u32 %v72, 4294901760
    %415 = vmatpush.msra.mxu0 %v414
    %v416 = vand.u32 %v71, 4294901760
    %417 = vmatpush.msra.mxu0 %v416
    %v418 = vand.u32 %v70, 4294901760
    %419 = vmatpush.msra.mxu0 %v418
    %v420 = vand.u32 %v69, 4294901760
    %421 = vmatpush.msra.mxu0 %v420
    %v422 = vand.u32 %v68, 4294901760
    %423 = vmatpush.msra.mxu0 %v422
    %v424 = vand.u32 %v67, 4294901760
    %425 = vmatpush.msra.mxu0 %v424
    %v426 = vand.u32 %v66, 4294901760
    %427 = vmatpush.msra.mxu0 %v426
    %v428 = vand.u32 %v65, 4294901760
    %429 = vmatpush.msra.mxu0 %v428
    %v430 = vand.u32 %v64, 4294901760
    %431 = vmatpush.msra.mxu0 %v430
    %v432 = vand.u32 %v63, 4294901760
    %433 = vmatpush.msra.mxu0 %v432
    %v434 = vand.u32 %v62, 4294901760
    %435 = vmatpush.msra.mxu0 %v434
    %v436 = vand.u32 %v61, 4294901760
    %437 = vmatpush.msra.mxu0 %v436
    %v438 = vand.u32 %v60, 4294901760
    %439 = vmatpush.msra.mxu0 %v438
    %v440 = vand.u32 %v59, 4294901760
    %441 = vmatpush.msra.mxu0 %v440
    %v442 = vand.u32 %v58, 4294901760
    %443 = vmatpush.msra.mxu0 %v442
    %v444 = vand.u32 %v57, 4294901760
    %445 = vmatpush.msra.mxu0 %v444
    %v446 = vand.u32 %v40, 4294901760
    %v447 = vsub.f32 %v40, %v446
    %v448 = vand.u32 %v447, 4294901760
    %v449 = vsub.f32 %v447, %v448
    %v450 = vand.u32 %v449, 4294901760
    %451 = vmatmul.f32.gmra.mxu0 %v450
    %v452 = vpop.f32.mrf.mxu0
    %v453 = vadd.f32 %v412, %v452
    %454 = vdwg.mxu0
    %v455 = vand.u32 %v72, 4294901760
    %v456 = vsub.f32 %v72, %v455
    %v457 = vand.u32 %v456, 4294901760
    %v458 = vsub.f32 %v456, %v457
    %v459 = vand.u32 %v458, 4294901760
    %460 = vmatpush.msra.mxu0 %v459
    %v461 = vand.u32 %v71, 4294901760
    %v462 = vsub.f32 %v71, %v461
    %v463 = vand.u32 %v462, 4294901760
    %v464 = vsub.f32 %v462, %v463
    %v465 = vand.u32 %v464, 4294901760
    %466 = vmatpush.msra.mxu0 %v465
    %v467 = vand.u32 %v70, 4294901760
    %v468 = vsub.f32 %v70, %v467
    %v469 = vand.u32 %v468, 4294901760
    %v470 = vsub.f32 %v468, %v469
    %v471 = vand.u32 %v470, 4294901760
    %472 = vmatpush.msra.mxu0 %v471
    %v473 = vand.u32 %v69, 4294901760
    %v474 = vsub.f32 %v69, %v473
    %v475 = vand.u32 %v474, 4294901760
    %v476 = vsub.f32 %v474, %v475
    %v477 = vand.u32 %v476, 4294901760
    %478 = vmatpush.msra.mxu0 %v477
    %v479 = vand.u32 %v68, 4294901760
    %v480 = vsub.f32 %v68, %v479
    %v481 = vand.u32 %v480, 4294901760
    %v482 = vsub.f32 %v480, %v481
    %v483 = vand.u32 %v482, 4294901760
    %484 = vmatpush.msra.mxu0 %v483
    %v485 = vand.u32 %v67, 4294901760
    %v486 = vsub.f32 %v67, %v485
    %v487 = vand.u32 %v486, 4294901760
    %v488 = vsub.f32 %v486, %v487
    %v489 = vand.u32 %v488, 4294901760
    %490 = vmatpush.msra.mxu0 %v489
    %v491 = vand.u32 %v66, 4294901760
    %v492 = vsub.f32 %v66, %v491
    %v493 = vand.u32 %v492, 4294901760
    %v494 = vsub.f32 %v492, %v493
    %v495 = vand.u32 %v494, 4294901760
    %496 = vmatpush.msra.mxu0 %v495
    %v497 = vand.u32 %v65, 4294901760
    %v498 = vsub.f32 %v65, %v497
    %v499 = vand.u32 %v498, 4294901760
    %v500 = vsub.f32 %v498, %v499
    %v501 = vand.u32 %v500, 4294901760
    %502 = vmatpush.msra.mxu0 %v501
    %v503 = vand.u32 %v64, 4294901760
    %v504 = vsub.f32 %v64, %v503
    %v505 = vand.u32 %v504, 4294901760
    %v506 = vsub.f32 %v504, %v505
    %v507 = vand.u32 %v506, 4294901760
    %508 = vmatpush.msra.mxu0 %v507
    %v509 = vand.u32 %v63, 4294901760
    %v510 = vsub.f32 %v63, %v509
    %v511 = vand.u32 %v510, 4294901760
    %v512 = vsub.f32 %v510, %v511
    %v513 = vand.u32 %v512, 4294901760
    %514 = vmatpush.msra.mxu0 %v513
    %v515 = vand.u32 %v62, 4294901760
    %v516 = vsub.f32 %v62, %v515
    %v517 = vand.u32 %v516, 4294901760
    %v518 = vsub.f32 %v516, %v517
    %v519 = vand.u32 %v518, 4294901760
    %520 = vmatpush.msra.mxu0 %v519
    %v521 = vand.u32 %v61, 4294901760
    %v522 = vsub.f32 %v61, %v521
    %v523 = vand.u32 %v522, 4294901760
    %v524 = vsub.f32 %v522, %v523
    %v525 = vand.u32 %v524, 4294901760
    %526 = vmatpush.msra.mxu0 %v525
    %v527 = vand.u32 %v60, 4294901760
    %v528 = vsub.f32 %v60, %v527
    %v529 = vand.u32 %v528, 4294901760
    %v530 = vsub.f32 %v528, %v529
    %v531 = vand.u32 %v530, 4294901760
    %532 = vmatpush.msra.mxu0 %v531
    %v533 = vand.u32 %v59, 4294901760
    %v534 = vsub.f32 %v59, %v533
    %v535 = vand.u32 %v534, 4294901760
    %v536 = vsub.f32 %v534, %v535
    %v537 = vand.u32 %v536, 4294901760
    %538 = vmatpush.msra.mxu0 %v537
    %v539 = vand.u32 %v58, 4294901760
    %v540 = vsub.f32 %v58, %v539
    %v541 = vand.u32 %v540, 4294901760
    %v542 = vsub.f32 %v540, %v541
    %v543 = vand.u32 %v542, 4294901760
    %544 = vmatpush.msra.mxu0 %v543
    %v545 = vand.u32 %v57, 4294901760
    %v546 = vsub.f32 %v57, %v545
    %v547 = vand.u32 %v546, 4294901760
    %v548 = vsub.f32 %v546, %v547
    %v549 = vand.u32 %v548, 4294901760
    %550 = vmatpush.msra.mxu0 %v549
    %v551 = vand.u32 %v40, 4294901760
    %552 = vmatmul.f32.gmra.mxu0 %v551
    %v553 = vpop.f32.mrf.mxu0
    %v554 = vadd.f32 %v453, %v553
    %555 = vdwg.mxu0
    %v556 = vand.u32 %v72, 4294901760
    %v557 = vsub.f32 %v72, %v556
    %558 = vmatpush.msra.mxu0 %v557
    %v559 = vand.u32 %v71, 4294901760
    %v560 = vsub.f32 %v71, %v559
    %561 = vmatpush.msra.mxu0 %v560
    %v562 = vand.u32 %v70, 4294901760
    %v563 = vsub.f32 %v70, %v562
    %564 = vmatpush.msra.mxu0 %v563
    %v565 = vand.u32 %v69, 4294901760
    %v566 = vsub.f32 %v69, %v565
    %567 = vmatpush.msra.mxu0 %v566
    %v568 = vand.u32 %v68, 4294901760
    %v569 = vsub.f32 %v68, %v568
    %570 = vmatpush.msra.mxu0 %v569
    %v571 = vand.u32 %v67, 4294901760
    %v572 = vsub.f32 %v67, %v571
    %573 = vmatpush.msra.mxu0 %v572
    %v574 = vand.u32 %v66, 4294901760
    %v575 = vsub.f32 %v66, %v574
    %576 = vmatpush.msra.mxu0 %v575
    %v577 = vand.u32 %v65, 4294901760
    %v578 = vsub.f32 %v65, %v577
    %579 = vmatpush.msra.mxu0 %v578
    %v580 = vand.u32 %v64, 4294901760
    %v581 = vsub.f32 %v64, %v580
    %582 = vmatpush.msra.mxu0 %v581
    %v583 = vand.u32 %v63, 4294901760
    %v584 = vsub.f32 %v63, %v583
    %585 = vmatpush.msra.mxu0 %v584
    %v586 = vand.u32 %v62, 4294901760
    %v587 = vsub.f32 %v62, %v586
    %588 = vmatpush.msra.mxu0 %v587
    %v589 = vand.u32 %v61, 4294901760
    %v590 = vsub.f32 %v61, %v589
    %591 = vmatpush.msra.mxu0 %v590
    %v592 = vand.u32 %v60, 4294901760
    %v593 = vsub.f32 %v60, %v592
    %594 = vmatpush.msra.mxu0 %v593
    %v595 = vand.u32 %v59, 4294901760
    %v596 = vsub.f32 %v59, %v595
    %597 = vmatpush.msra.mxu0 %v596
    %v598 = vand.u32 %v58, 4294901760
    %v599 = vsub.f32 %v58, %v598
    %600 = vmatpush.msra.mxu0 %v599
    %v601 = vand.u32 %v57, 4294901760
    %v602 = vsub.f32 %v57, %v601
    %603 = vmatpush.msra.mxu0 %v602
    %v604 = vand.u32 %v40, 4294901760
    %v605 = vsub.f32 %v40, %v604
    %606 = vmatmul.f32.gmra.mxu0 %v605
    %v607 = vpop.f32.mrf.mxu0
    %v608 = vadd.f32 %v554, %v607
    %609 = vdwg.mxu0
    %v610 = vand.u32 %v72, 4294901760
    %611 = vmatpush.msra.mxu0 %v610
    %v612 = vand.u32 %v71, 4294901760
    %613 = vmatpush.msra.mxu0 %v612
    %v614 = vand.u32 %v70, 4294901760
    %615 = vmatpush.msra.mxu0 %v614
    %v616 = vand.u32 %v69, 4294901760
    %617 = vmatpush.msra.mxu0 %v616
    %v618 = vand.u32 %v68, 4294901760
    %619 = vmatpush.msra.mxu0 %v618
    %v620 = vand.u32 %v67, 4294901760
    %621 = vmatpush.msra.mxu0 %v620
    %v622 = vand.u32 %v66, 4294901760
    %623 = vmatpush.msra.mxu0 %v622
    %v624 = vand.u32 %v65, 4294901760
    %625 = vmatpush.msra.mxu0 %v624
    %v626 = vand.u32 %v64, 4294901760
    %627 = vmatpush.msra.mxu0 %v626
    %v628 = vand.u32 %v63, 4294901760
    %629 = vmatpush.msra.mxu0 %v628
    %v630 = vand.u32 %v62, 4294901760
    %631 = vmatpush.msra.mxu0 %v630
    %v632 = vand.u32 %v61, 4294901760
    %633 = vmatpush.msra.mxu0 %v632
    %v634 = vand.u32 %v60, 4294901760
    %635 = vmatpush.msra.mxu0 %v634
    %v636 = vand.u32 %v59, 4294901760
    %637 = vmatpush.msra.mxu0 %v636
    %v638 = vand.u32 %v58, 4294901760
    %639 = vmatpush.msra.mxu0 %v638
    %v640 = vand.u32 %v57, 4294901760
    %641 = vmatpush.msra.mxu0 %v640
    %v642 = vand.u32 %v40, 4294901760
    %v643 = vsub.f32 %v40, %v642
    %v644 = vand.u32 %v643, 4294901760
    %645 = vmatmul.f32.gmra.mxu0 %v644
    %v646 = vpop.f32.mrf.mxu0
    %v647 = vadd.f32 %v608, %v646
    %648 = vdwg.mxu0
    %v649 = vand.u32 %v72, 4294901760
    %v650 = vsub.f32 %v72, %v649
    %v651 = vand.u32 %v650, 4294901760
    %652 = vmatpush.msra.mxu0 %v651
    %v653 = vand.u32 %v71, 4294901760
    %v654 = vsub.f32 %v71, %v653
    %v655 = vand.u32 %v654, 4294901760
    %656 = vmatpush.msra.mxu0 %v655
    %v657 = vand.u32 %v70, 4294901760
    %v658 = vsub.f32 %v70, %v657
    %v659 = vand.u32 %v658, 4294901760
    %660 = vmatpush.msra.mxu0 %v659
    %v661 = vand.u32 %v69, 4294901760
    %v662 = vsub.f32 %v69, %v661
    %v663 = vand.u32 %v662, 4294901760
    %664 = vmatpush.msra.mxu0 %v663
    %v665 = vand.u32 %v68, 4294901760
    %v666 = vsub.f32 %v68, %v665
    %v667 = vand.u32 %v666, 4294901760
    %668 = vmatpush.msra.mxu0 %v667
    %v669 = vand.u32 %v67, 4294901760
    %v670 = vsub.f32 %v67, %v669
    %v671 = vand.u32 %v670, 4294901760
    %672 = vmatpush.msra.mxu0 %v671
    %v673 = vand.u32 %v66, 4294901760
    %v674 = vsub.f32 %v66, %v673
    %v675 = vand.u32 %v674, 4294901760
    %676 = vmatpush.msra.mxu0 %v675
    %v677 = vand.u32 %v65, 4294901760
    %v678 = vsub.f32 %v65, %v677
    %v679 = vand.u32 %v678, 4294901760
    %680 = vmatpush.msra.mxu0 %v679
    %v681 = vand.u32 %v64, 4294901760
    %v682 = vsub.f32 %v64, %v681
    %v683 = vand.u32 %v682, 4294901760
    %684 = vmatpush.msra.mxu0 %v683
    %v685 = vand.u32 %v63, 4294901760
    %v686 = vsub.f32 %v63, %v685
    %v687 = vand.u32 %v686, 4294901760
    %688 = vmatpush.msra.mxu0 %v687
    %v689 = vand.u32 %v62, 4294901760
    %v690 = vsub.f32 %v62, %v689
    %v691 = vand.u32 %v690, 4294901760
    %692 = vmatpush.msra.mxu0 %v691
    %v693 = vand.u32 %v61, 4294901760
    %v694 = vsub.f32 %v61, %v693
    %v695 = vand.u32 %v694, 4294901760
    %696 = vmatpush.msra.mxu0 %v695
    %v697 = vand.u32 %v60, 4294901760
    %v698 = vsub.f32 %v60, %v697
    %v699 = vand.u32 %v698, 4294901760
    %700 = vmatpush.msra.mxu0 %v699
    %v701 = vand.u32 %v59, 4294901760
    %v702 = vsub.f32 %v59, %v701
    %v703 = vand.u32 %v702, 4294901760
    %704 = vmatpush.msra.mxu0 %v703
    %v705 = vand.u32 %v58, 4294901760
    %v706 = vsub.f32 %v58, %v705
    %v707 = vand.u32 %v706, 4294901760
    %708 = vmatpush.msra.mxu0 %v707
    %v709 = vand.u32 %v57, 4294901760
    %v710 = vsub.f32 %v57, %v709
    %v711 = vand.u32 %v710, 4294901760
    %712 = vmatpush.msra.mxu0 %v711
    %v713 = vand.u32 %v40, 4294901760
    %714 = vmatmul.f32.gmra.mxu0 %v713
    %v715 = vpop.f32.mrf.mxu0
    %v716 = vadd.f32 %v647, %v715
    %717 = vdwg.mxu0
    %v718 = vand.u32 %v72, 4294901760
    %719 = vmatpush.msra.mxu0 %v718
    %v720 = vand.u32 %v71, 4294901760
    %721 = vmatpush.msra.mxu0 %v720
    %v722 = vand.u32 %v70, 4294901760
    %723 = vmatpush.msra.mxu0 %v722
    %v724 = vand.u32 %v69, 4294901760
    %725 = vmatpush.msra.mxu0 %v724
    %v726 = vand.u32 %v68, 4294901760
    %727 = vmatpush.msra.mxu0 %v726
    %v728 = vand.u32 %v67, 4294901760
    %729 = vmatpush.msra.mxu0 %v728
    %v730 = vand.u32 %v66, 4294901760
    %731 = vmatpush.msra.mxu0 %v730
    %v732 = vand.u32 %v65, 4294901760
    %733 = vmatpush.msra.mxu0 %v732
    %v734 = vand.u32 %v64, 4294901760
    %735 = vmatpush.msra.mxu0 %v734
    %v736 = vand.u32 %v63, 4294901760
    %737 = vmatpush.msra.mxu0 %v736
    %v738 = vand.u32 %v62, 4294901760
    %739 = vmatpush.msra.mxu0 %v738
    %v740 = vand.u32 %v61, 4294901760
    %741 = vmatpush.msra.mxu0 %v740
    %v742 = vand.u32 %v60, 4294901760
    %743 = vmatpush.msra.mxu0 %v742
    %v744 = vand.u32 %v59, 4294901760
    %745 = vmatpush.msra.mxu0 %v744
    %v746 = vand.u32 %v58, 4294901760
    %747 = vmatpush.msra.mxu0 %v746
    %v748 = vand.u32 %v57, 4294901760
    %749 = vmatpush.msra.mxu0 %v748
    %v750 = vand.u32 %v40, 4294901760
    %751 = vmatmul.f32.gmra.mxu0 %v750
    %v752 = vpop.f32.mrf.mxu0
    %v753 = vadd.f32 %v716, %v752
    %754 = vdwg.mxu0
    %v755 = vld [vmem:[%s3] sm:$0x1]
    %v756 = vld [vmem:[%s4] sm:$0x1]
    %vm757 = vcmask 130048
    %v758 = vsel %vm757, %v753, 0.0
    %759 = vadd.xlane.f32.xlu0 %v758
    %v760 = vpop.xlane.xlu0 %759
    %v761 = vrcp.pop 16.0
    %v762 = vmul.f32 16.0, %v761
    %v763 = vsub.f32 1.0, %v762
    %v764 = vmul.f32 %v761, %v763
    %v765 = vadd.f32 %v761, %v764
    %vm766 = vweird.f32 %v761
    %v767 = vsel %vm766, %v761, %v765
    %v768 = vmul.f32 %v760, %v767
    %v769 = vsub.f32 %v753, %v768
    %v770 = vmul.f32 %v769, %v769
    %v771 = vsel %vm757, %v770, 0.0
    %772 = vadd.xlane.f32.xlu0 %v771
    %v773 = vpop.xlane.xlu0 %772
    %v774 = vmul.f32 %v773, %v767
    %v775 = vadd.f32 %v774, 1e-05
    %v776 = vrsqrt.pop %v775
    %v777 = vmul.f32 %v776, %v775
    %v778 = vmul.f32 %v777, %v776
    %v779 = vmul.f32 0.5, %v778
    %v780 = vsub.f32 1.5, %v779
    %v781 = vmul.f32 %v776, %v780
    %vm782 = vweird.f32 %v775
    %vm783 = vweird.f32 %v776
    %vm784 = vmor %vm782, %vm783
    %v785 = vsel %vm784, %v776, %v781
    %v786 = vmul.f32 %v769, %v785
    %v788 = vperm.slane %v755, 0
    %v790 = vmul.f32 %v786, %v788
    %v792 = vperm.slane %v756, 0
    %v794 = vadd.f32 %v790, %v792
    %v795 = vld [vmem:[%s1] sm:$0xff]
    %v796 = vld [vmem:[%s5] sm:$0x1]
    %798 = vset.pattern.permute.xlu0 0
    %799 = vperm.xlu0 %798, %v795
    %v800 = vpop.permute.xlu0 %799
    %v803 = vperm.slane %v796, 0
    %v805 = vmul.f32 %v800, %v803
    %v806 = vld [vmem:[%s6] sm:$0x1]
    %v808 = vperm.slane %v806, 0
    %v810 = vadd.f32 %v805, %v808
    %vm811 = vcmp.ge.f32.partialorder %v810, 0.0
    %v812 = vmul.f32 %v810, 0.01
    %v813 = vsel %vm811, %v810, %v812
    %v814 = vld [vmem:[%s7] sm:$0xff]
    %v815 = vld [vmem:[%s7 + $0x8] sm:$0xff]
    %v816 = vld [vmem:[%s7 + $0x10] sm:$0xff]
    %v817 = vld [vmem:[%s7 + $0x18] sm:$0xff]
    %v818 = vld [vmem:[%s7 + $0x20] sm:$0xff]
    %v819 = vld [vmem:[%s7 + $0x28] sm:$0xff]
    %v820 = vld [vmem:[%s7 + $0x30] sm:$0xff]
    %v821 = vld [vmem:[%s7 + $0x38] sm:$0xff]
    %v822 = vld [vmem:[%s8] sm:$0x1]
    %v824 = vperm.slane %v822, 0
    %vm826 = vcmask 523264
    %v828 = vsel %vm826, %v813, 0
    %830 = vmatpush.msra.mxu0 0.0
    %831 = vmatpush.msra.mxu0 0.0
    %832 = vmatpush.msra.mxu0 0.0
    %833 = vmatpush.msra.mxu0 0.0
    %834 = vmatpush.msra.mxu0 0.0
    %835 = vmatpush.msra.mxu0 0.0
    %836 = vmatpush.msra.mxu0 0.0
    %837 = vmatpush.msra.mxu0 0.0
    %v838 = vand.u32 %v821, 4294901760
    %839 = vmatpush.msra.mxu0 %v838
    %v840 = vand.u32 %v820, 4294901760
    %841 = vmatpush.msra.mxu0 %v840
    %v842 = vand.u32 %v819, 4294901760
    %843 = vmatpush.msra.mxu0 %v842
    %v844 = vand.u32 %v818, 4294901760
    %845 = vmatpush.msra.mxu0 %v844
    %v846 = vand.u32 %v817, 4294901760
    %847 = vmatpush.msra.mxu0 %v846
    %v848 = vand.u32 %v816, 4294901760
    %849 = vmatpush.msra.mxu0 %v848
    %v850 = vand.u32 %v815, 4294901760
    %851 = vmatpush.msra.mxu0 %v850
    %v852 = vand.u32 %v814, 4294901760
    %853 = vmatpush.msra.mxu0 %v852
    %v854 = vand.u32 %v828, 4294901760
    %v855 = vsub.f32 %v828, %v854
    %v856 = vand.u32 %v855, 4294901760
    %v857 = vsub.f32 %v855, %v856
    %v858 = vand.u32 %v857, 4294901760
    %859 = vmatmul.f32.gmra.mxu0 %v858
    %v860 = vpop.f32.mrf.mxu0
    %v861 = vadd.f32 %v824, %v860
    %862 = vdwg.mxu0
    %863 = vmatpush.msra.mxu0 0.0
    %864 = vmatpush.msra.mxu0 0.0
    %865 = vmatpush.msra.mxu0 0.0
    %866 = vmatpush.msra.mxu0 0.0
    %867 = vmatpush.msra.mxu0 0.0
    %868 = vmatpush.msra.mxu0 0.0
    %869 = vmatpush.msra.mxu0 0.0
    %870 = vmatpush.msra.mxu0 0.0
    %v871 = vand.u32 %v821, 4294901760
    %v872 = vsub.f32 %v821, %v871
    %v873 = vand.u32 %v872, 4294901760
    %v874 = vsub.f32 %v872, %v873
    %v875 = vand.u32 %v874, 4294901760
    %876 = vmatpush.msra.mxu0 %v875
    %v877 = vand.u32 %v820, 4294901760
    %v878 = vsub.f32 %v820, %v877
    %v879 = vand.u32 %v878, 4294901760
    %v880 = vsub.f32 %v878, %v879
    %v881 = vand.u32 %v880, 4294901760
    %882 = vmatpush.msra.mxu0 %v881
    %v883 = vand.u32 %v819, 4294901760
    %v884 = vsub.f32 %v819, %v883
    %v885 = vand.u32 %v884, 4294901760
    %v886 = vsub.f32 %v884, %v885
    %v887 = vand.u32 %v886, 4294901760
    %888 = vmatpush.msra.mxu0 %v887
    %v889 = vand.u32 %v818, 4294901760
    %v890 = vsub.f32 %v818, %v889
    %v891 = vand.u32 %v890, 4294901760
    %v892 = vsub.f32 %v890, %v891
    %v893 = vand.u32 %v892, 4294901760
    %894 = vmatpush.msra.mxu0 %v893
    %v895 = vand.u32 %v817, 4294901760
    %v896 = vsub.f32 %v817, %v895
    %v897 = vand.u32 %v896, 4294901760
    %v898 = vsub.f32 %v896, %v897
    %v899 = vand.u32 %v898, 4294901760
    %900 = vmatpush.msra.mxu0 %v899
    %v901 = vand.u32 %v816, 4294901760
    %v902 = vsub.f32 %v816, %v901
    %v903 = vand.u32 %v902, 4294901760
    %v904 = vsub.f32 %v902, %v903
    %v905 = vand.u32 %v904, 4294901760
    %906 = vmatpush.msra.mxu0 %v905
    %v907 = vand.u32 %v815, 4294901760
    %v908 = vsub.f32 %v815, %v907
    %v909 = vand.u32 %v908, 4294901760
    %v910 = vsub.f32 %v908, %v909
    %v911 = vand.u32 %v910, 4294901760
    %912 = vmatpush.msra.mxu0 %v911
    %v913 = vand.u32 %v814, 4294901760
    %v914 = vsub.f32 %v814, %v913
    %v915 = vand.u32 %v914, 4294901760
    %v916 = vsub.f32 %v914, %v915
    %v917 = vand.u32 %v916, 4294901760
    %918 = vmatpush.msra.mxu0 %v917
    %v919 = vand.u32 %v828, 4294901760
    %920 = vmatmul.f32.gmra.mxu0 %v919
    %v921 = vpop.f32.mrf.mxu0
    %v922 = vadd.f32 %v861, %v921
    %923 = vdwg.mxu0
    %924 = vmatpush.msra.mxu0 0.0
    %925 = vmatpush.msra.mxu0 0.0
    %926 = vmatpush.msra.mxu0 0.0
    %927 = vmatpush.msra.mxu0 0.0
    %928 = vmatpush.msra.mxu0 0.0
    %929 = vmatpush.msra.mxu0 0.0
    %930 = vmatpush.msra.mxu0 0.0
    %931 = vmatpush.msra.mxu0 0.0
    %v932 = vand.u32 %v821, 4294901760
    %v933 = vsub.f32 %v821, %v932
    %934 = vmatpush.msra.mxu0 %v933
    %v935 = vand.u32 %v820, 4294901760
    %v936 = vsub.f32 %v820, %v935
    %937 = vmatpush.msra.mxu0 %v936
    %v938 = vand.u32 %v819, 4294901760
    %v939 = vsub.f32 %v819, %v938
    %940 = vmatpush.msra.mxu0 %v939
    %v941 = vand.u32 %v818, 4294901760
    %v942 = vsub.f32 %v818, %v941
    %943 = vmatpush.msra.mxu0 %v942
    %v944 = vand.u32 %v817, 4294901760
    %v945 = vsub.f32 %v817, %v944
    %946 = vmatpush.msra.mxu0 %v945
    %v947 = vand.u32 %v816, 4294901760
    %v948 = vsub.f32 %v816, %v947
    %949 = vmatpush.msra.mxu0 %v948
    %v950 = vand.u32 %v815, 4294901760
    %v951 = vsub.f32 %v815, %v950
    %952 = vmatpush.msra.mxu0 %v951
    %v953 = vand.u32 %v814, 4294901760
    %v954 = vsub.f32 %v814, %v953
    %955 = vmatpush.msra.mxu0 %v954
    %v956 = vand.u32 %v828, 4294901760
    %v957 = vsub.f32 %v828, %v956
    %958 = vmatmul.f32.gmra.mxu0 %v957
    %v959 = vpop.f32.mrf.mxu0
    %v960 = vadd.f32 %v922, %v959
    %961 = vdwg.mxu0
    %962 = vmatpush.msra.mxu0 0.0
    %963 = vmatpush.msra.mxu0 0.0
    %964 = vmatpush.msra.mxu0 0.0
    %965 = vmatpush.msra.mxu0 0.0
    %966 = vmatpush.msra.mxu0 0.0
    %967 = vmatpush.msra.mxu0 0.0
    %968 = vmatpush.msra.mxu0 0.0
    %969 = vmatpush.msra.mxu0 0.0
    %v970 = vand.u32 %v821, 4294901760
    %971 = vmatpush.msra.mxu0 %v970
    %v972 = vand.u32 %v820, 4294901760
    %973 = vmatpush.msra.mxu0 %v972
    %v974 = vand.u32 %v819, 4294901760
    %975 = vmatpush.msra.mxu0 %v974
    %v976 = vand.u32 %v818, 4294901760
    %977 = vmatpush.msra.mxu0 %v976
    %v978 = vand.u32 %v817, 4294901760
    %979 = vmatpush.msra.mxu0 %v978
    %v980 = vand.u32 %v816, 4294901760
    %981 = vmatpush.msra.mxu0 %v980
    %v982 = vand.u32 %v815, 4294901760
    %983 = vmatpush.msra.mxu0 %v982
    %v984 = vand.u32 %v814, 4294901760
    %985 = vmatpush.msra.mxu0 %v984
    %v986 = vand.u32 %v828, 4294901760
    %v987 = vsub.f32 %v828, %v986
    %v988 = vand.u32 %v987, 4294901760
    %989 = vmatmul.f32.gmra.mxu0 %v988
    %v990 = vpop.f32.mrf.mxu0
    %v991 = vadd.f32 %v960, %v990
    %992 = vdwg.mxu0
    %993 = vmatpush.msra.mxu0 0.0
    %994 = vmatpush.msra.mxu0 0.0
    %995 = vmatpush.msra.mxu0 0.0
    %996 = vmatpush.msra.mxu0 0.0
    %997 = vmatpush.msra.mxu0 0.0
    %998 = vmatpush.msra.mxu0 0.0
    %999 = vmatpush.msra.mxu0 0.0
    %1000 = vmatpush.msra.mxu0 0.0
    %v1001 = vand.u32 %v821, 4294901760
    %v1002 = vsub.f32 %v821, %v1001
    %v1003 = vand.u32 %v1002, 4294901760
    %1004 = vmatpush.msra.mxu0 %v1003
    %v1005 = vand.u32 %v820, 4294901760
    %v1006 = vsub.f32 %v820, %v1005
    %v1007 = vand.u32 %v1006, 4294901760
    %1008 = vmatpush.msra.mxu0 %v1007
    %v1009 = vand.u32 %v819, 4294901760
    %v1010 = vsub.f32 %v819, %v1009
    %v1011 = vand.u32 %v1010, 4294901760
    %1012 = vmatpush.msra.mxu0 %v1011
    %v1013 = vand.u32 %v818, 4294901760
    %v1014 = vsub.f32 %v818, %v1013
    %v1015 = vand.u32 %v1014, 4294901760
    %1016 = vmatpush.msra.mxu0 %v1015
    %v1017 = vand.u32 %v817, 4294901760
    %v1018 = vsub.f32 %v817, %v1017
    %v1019 = vand.u32 %v1018, 4294901760
    %1020 = vmatpush.msra.mxu0 %v1019
    %v1021 = vand.u32 %v816, 4294901760
    %v1022 = vsub.f32 %v816, %v1021
    %v1023 = vand.u32 %v1022, 4294901760
    %1024 = vmatpush.msra.mxu0 %v1023
    %v1025 = vand.u32 %v815, 4294901760
    %v1026 = vsub.f32 %v815, %v1025
    %v1027 = vand.u32 %v1026, 4294901760
    %1028 = vmatpush.msra.mxu0 %v1027
    %v1029 = vand.u32 %v814, 4294901760
    %v1030 = vsub.f32 %v814, %v1029
    %v1031 = vand.u32 %v1030, 4294901760
    %1032 = vmatpush.msra.mxu0 %v1031
    %v1033 = vand.u32 %v828, 4294901760
    %1034 = vmatmul.f32.gmra.mxu0 %v1033
    %v1035 = vpop.f32.mrf.mxu0
    %v1036 = vadd.f32 %v991, %v1035
    %1037 = vdwg.mxu0
    %1038 = vmatpush.msra.mxu0 0.0
    %1039 = vmatpush.msra.mxu0 0.0
    %1040 = vmatpush.msra.mxu0 0.0
    %1041 = vmatpush.msra.mxu0 0.0
    %1042 = vmatpush.msra.mxu0 0.0
    %1043 = vmatpush.msra.mxu0 0.0
    %1044 = vmatpush.msra.mxu0 0.0
    %1045 = vmatpush.msra.mxu0 0.0
    %v1046 = vand.u32 %v821, 4294901760
    %1047 = vmatpush.msra.mxu0 %v1046
    %v1048 = vand.u32 %v820, 4294901760
    %1049 = vmatpush.msra.mxu0 %v1048
    %v1050 = vand.u32 %v819, 4294901760
    %1051 = vmatpush.msra.mxu0 %v1050
    %v1052 = vand.u32 %v818, 4294901760
    %1053 = vmatpush.msra.mxu0 %v1052
    %v1054 = vand.u32 %v817, 4294901760
    %1055 = vmatpush.msra.mxu0 %v1054
    %v1056 = vand.u32 %v816, 4294901760
    %1057 = vmatpush.msra.mxu0 %v1056
    %v1058 = vand.u32 %v815, 4294901760
    %1059 = vmatpush.msra.mxu0 %v1058
    %v1060 = vand.u32 %v814, 4294901760
    %1061 = vmatpush.msra.mxu0 %v1060
    %v1062 = vand.u32 %v828, 4294901760
    %1063 = vmatmul.f32.gmra.mxu0 %v1062
    %v1064 = vpop.f32.mrf.mxu0
    %v1065 = vadd.f32 %v1036, %v1064
    %1066 = vdwg.mxu0
    %vm1067 = vcmp.ge.f32.partialorder %v1065, 0.0
    %v1068 = vmul.f32 %v1065, 0.01
    %v1069 = vsel %vm1067, %v1065, %v1068
    %v1070 = vld [vmem:[%s9] sm:$0xff]
    %v1071 = vld [vmem:[%s9 + $0x8] sm:$0xff]
    %v1072 = vld [vmem:[%s9 + $0x10] sm:$0xff]
    %v1073 = vld [vmem:[%s9 + $0x18] sm:$0xff]
    %v1074 = vld [vmem:[%s9 + $0x20] sm:$0xff]
    %v1075 = vld [vmem:[%s9 + $0x28] sm:$0xff]
    %v1076 = vld [vmem:[%s9 + $0x30] sm:$0xff]
    %v1077 = vld [vmem:[%s9 + $0x38] sm:$0xff]
    %v1078 = vld [vmem:[%s10] sm:$0x1]
    %v1080 = vperm.slane %v1078, 0
    %v1083 = vsel %vm826, %v1069, 0
    %1085 = vmatpush.msra.mxu0 0.0
    %1086 = vmatpush.msra.mxu0 0.0
    %1087 = vmatpush.msra.mxu0 0.0
    %1088 = vmatpush.msra.mxu0 0.0
    %1089 = vmatpush.msra.mxu0 0.0
    %1090 = vmatpush.msra.mxu0 0.0
    %1091 = vmatpush.msra.mxu0 0.0
    %1092 = vmatpush.msra.mxu0 0.0
    %v1093 = vand.u32 %v1077, 4294901760
    %1094 = vmatpush.msra.mxu0 %v1093
    %v1095 = vand.u32 %v1076, 4294901760
    %1096 = vmatpush.msra.mxu0 %v1095
    %v1097 = vand.u32 %v1075, 4294901760
    %1098 = vmatpush.msra.mxu0 %v1097
    %v1099 = vand.u32 %v1074, 4294901760
    %1100 = vmatpush.msra.mxu0 %v1099
    %v1101 = vand.u32 %v1073, 4294901760
    %1102 = vmatpush.msra.mxu0 %v1101
    %v1103 = vand.u32 %v1072, 4294901760
    %1104 = vmatpush.msra.mxu0 %v1103
    %v1105 = vand.u32 %v1071, 4294901760
    %1106 = vmatpush.msra.mxu0 %v1105
    %v1107 = vand.u32 %v1070, 4294901760
    %1108 = vmatpush.msra.mxu0 %v1107
    %v1109 = vand.u32 %v1083, 4294901760
    %v1110 = vsub.f32 %v1083, %v1109
    %v1111 = vand.u32 %v1110, 4294901760
    %v1112 = vsub.f32 %v1110, %v1111
    %v1113 = vand.u32 %v1112, 4294901760
    %1114 = vmatmul.f32.gmra.mxu0 %v1113
    %v1115 = vpop.f32.mrf.mxu0
    %v1116 = vadd.f32 %v1080, %v1115
    %1117 = vdwg.mxu0
    %1118 = vmatpush.msra.mxu0 0.0
    %1119 = vmatpush.msra.mxu0 0.0
    %1120 = vmatpush.msra.mxu0 0.0
    %1121 = vmatpush.msra.mxu0 0.0
    %1122 = vmatpush.msra.mxu0 0.0
    %1123 = vmatpush.msra.mxu0 0.0
    %1124 = vmatpush.msra.mxu0 0.0
    %1125 = vmatpush.msra.mxu0 0.0
    %v1126 = vand.u32 %v1077, 4294901760
    %v1127 = vsub.f32 %v1077, %v1126
    %v1128 = vand.u32 %v1127, 4294901760
    %v1129 = vsub.f32 %v1127, %v1128
    %v1130 = vand.u32 %v1129, 4294901760
    %1131 = vmatpush.msra.mxu0 %v1130
    %v1132 = vand.u32 %v1076, 4294901760
    %v1133 = vsub.f32 %v1076, %v1132
    %v1134 = vand.u32 %v1133, 4294901760
    %v1135 = vsub.f32 %v1133, %v1134
    %v1136 = vand.u32 %v1135, 4294901760
    %1137 = vmatpush.msra.mxu0 %v1136
    %v1138 = vand.u32 %v1075, 4294901760
    %v1139 = vsub.f32 %v1075, %v1138
    %v1140 = vand.u32 %v1139, 4294901760
    %v1141 = vsub.f32 %v1139, %v1140
    %v1142 = vand.u32 %v1141, 4294901760
    %1143 = vmatpush.msra.mxu0 %v1142
    %v1144 = vand.u32 %v1074, 4294901760
    %v1145 = vsub.f32 %v1074, %v1144
    %v1146 = vand.u32 %v1145, 4294901760
    %v1147 = vsub.f32 %v1145, %v1146
    %v1148 = vand.u32 %v1147, 4294901760
    %1149 = vmatpush.msra.mxu0 %v1148
    %v1150 = vand.u32 %v1073, 4294901760
    %v1151 = vsub.f32 %v1073, %v1150
    %v1152 = vand.u32 %v1151, 4294901760
    %v1153 = vsub.f32 %v1151, %v1152
    %v1154 = vand.u32 %v1153, 4294901760
    %1155 = vmatpush.msra.mxu0 %v1154
    %v1156 = vand.u32 %v1072, 4294901760
    %v1157 = vsub.f32 %v1072, %v1156
    %v1158 = vand.u32 %v1157, 4294901760
    %v1159 = vsub.f32 %v1157, %v1158
    %v1160 = vand.u32 %v1159, 4294901760
    %1161 = vmatpush.msra.mxu0 %v1160
    %v1162 = vand.u32 %v1071, 4294901760
    %v1163 = vsub.f32 %v1071, %v1162
    %v1164 = vand.u32 %v1163, 4294901760
    %v1165 = vsub.f32 %v1163, %v1164
    %v1166 = vand.u32 %v1165, 4294901760
    %1167 = vmatpush.msra.mxu0 %v1166
    %v1168 = vand.u32 %v1070, 4294901760
    %v1169 = vsub.f32 %v1070, %v1168
    %v1170 = vand.u32 %v1169, 4294901760
    %v1171 = vsub.f32 %v1169, %v1170
    %v1172 = vand.u32 %v1171, 4294901760
    %1173 = vmatpush.msra.mxu0 %v1172
    %v1174 = vand.u32 %v1083, 4294901760
    %1175 = vmatmul.f32.gmra.mxu0 %v1174
    %v1176 = vpop.f32.mrf.mxu0
    %v1177 = vadd.f32 %v1116, %v1176
    %1178 = vdwg.mxu0
    %1179 = vmatpush.msra.mxu0 0.0
    %1180 = vmatpush.msra.mxu0 0.0
    %1181 = vmatpush.msra.mxu0 0.0
    %1182 = vmatpush.msra.mxu0 0.0
    %1183 = vmatpush.msra.mxu0 0.0
    %1184 = vmatpush.msra.mxu0 0.0
    %1185 = vmatpush.msra.mxu0 0.0
    %1186 = vmatpush.msra.mxu0 0.0
    %v1187 = vand.u32 %v1077, 4294901760
    %v1188 = vsub.f32 %v1077, %v1187
    %1189 = vmatpush.msra.mxu0 %v1188
    %v1190 = vand.u32 %v1076, 4294901760
    %v1191 = vsub.f32 %v1076, %v1190
    %1192 = vmatpush.msra.mxu0 %v1191
    %v1193 = vand.u32 %v1075, 4294901760
    %v1194 = vsub.f32 %v1075, %v1193
    %1195 = vmatpush.msra.mxu0 %v1194
    %v1196 = vand.u32 %v1074, 4294901760
    %v1197 = vsub.f32 %v1074, %v1196
    %1198 = vmatpush.msra.mxu0 %v1197
    %v1199 = vand.u32 %v1073, 4294901760
    %v1200 = vsub.f32 %v1073, %v1199
    %1201 = vmatpush.msra.mxu0 %v1200
    %v1202 = vand.u32 %v1072, 4294901760
    %v1203 = vsub.f32 %v1072, %v1202
    %1204 = vmatpush.msra.mxu0 %v1203
    %v1205 = vand.u32 %v1071, 4294901760
    %v1206 = vsub.f32 %v1071, %v1205
    %1207 = vmatpush.msra.mxu0 %v1206
    %v1208 = vand.u32 %v1070, 4294901760
    %v1209 = vsub.f32 %v1070, %v1208
    %1210 = vmatpush.msra.mxu0 %v1209
    %v1211 = vand.u32 %v1083, 4294901760
    %v1212 = vsub.f32 %v1083, %v1211
    %1213 = vmatmul.f32.gmra.mxu0 %v1212
    %v1214 = vpop.f32.mrf.mxu0
    %v1215 = vadd.f32 %v1177, %v1214
    %1216 = vdwg.mxu0
    %1217 = vmatpush.msra.mxu0 0.0
    %1218 = vmatpush.msra.mxu0 0.0
    %1219 = vmatpush.msra.mxu0 0.0
    %1220 = vmatpush.msra.mxu0 0.0
    %1221 = vmatpush.msra.mxu0 0.0
    %1222 = vmatpush.msra.mxu0 0.0
    %1223 = vmatpush.msra.mxu0 0.0
    %1224 = vmatpush.msra.mxu0 0.0
    %v1225 = vand.u32 %v1077, 4294901760
    %1226 = vmatpush.msra.mxu0 %v1225
    %v1227 = vand.u32 %v1076, 4294901760
    %1228 = vmatpush.msra.mxu0 %v1227
    %v1229 = vand.u32 %v1075, 4294901760
    %1230 = vmatpush.msra.mxu0 %v1229
    %v1231 = vand.u32 %v1074, 4294901760
    %1232 = vmatpush.msra.mxu0 %v1231
    %v1233 = vand.u32 %v1073, 4294901760
    %1234 = vmatpush.msra.mxu0 %v1233
    %v1235 = vand.u32 %v1072, 4294901760
    %1236 = vmatpush.msra.mxu0 %v1235
    %v1237 = vand.u32 %v1071, 4294901760
    %1238 = vmatpush.msra.mxu0 %v1237
    %v1239 = vand.u32 %v1070, 4294901760
    %1240 = vmatpush.msra.mxu0 %v1239
    %v1241 = vand.u32 %v1083, 4294901760
    %v1242 = vsub.f32 %v1083, %v1241
    %v1243 = vand.u32 %v1242, 4294901760
    %1244 = vmatmul.f32.gmra.mxu0 %v1243
    %v1245 = vpop.f32.mrf.mxu0
    %v1246 = vadd.f32 %v1215, %v1245
    %1247 = vdwg.mxu0
    %1248 = vmatpush.msra.mxu0 0.0
    %1249 = vmatpush.msra.mxu0 0.0
    %1250 = vmatpush.msra.mxu0 0.0
    %1251 = vmatpush.msra.mxu0 0.0
    %1252 = vmatpush.msra.mxu0 0.0
    %1253 = vmatpush.msra.mxu0 0.0
    %1254 = vmatpush.msra.mxu0 0.0
    %1255 = vmatpush.msra.mxu0 0.0
    %v1256 = vand.u32 %v1077, 4294901760
    %v1257 = vsub.f32 %v1077, %v1256
    %v1258 = vand.u32 %v1257, 4294901760
    %1259 = vmatpush.msra.mxu0 %v1258
    %v1260 = vand.u32 %v1076, 4294901760
    %v1261 = vsub.f32 %v1076, %v1260
    %v1262 = vand.u32 %v1261, 4294901760
    %1263 = vmatpush.msra.mxu0 %v1262
    %v1264 = vand.u32 %v1075, 4294901760
    %v1265 = vsub.f32 %v1075, %v1264
    %v1266 = vand.u32 %v1265, 4294901760
    %1267 = vmatpush.msra.mxu0 %v1266
    %v1268 = vand.u32 %v1074, 4294901760
    %v1269 = vsub.f32 %v1074, %v1268
    %v1270 = vand.u32 %v1269, 4294901760
    %1271 = vmatpush.msra.mxu0 %v1270
    %v1272 = vand.u32 %v1073, 4294901760
    %v1273 = vsub.f32 %v1073, %v1272
    %v1274 = vand.u32 %v1273, 4294901760
    %1275 = vmatpush.msra.mxu0 %v1274
    %v1276 = vand.u32 %v1072, 4294901760
    %v1277 = vsub.f32 %v1072, %v1276
    %v1278 = vand.u32 %v1277, 4294901760
    %1279 = vmatpush.msra.mxu0 %v1278
    %v1280 = vand.u32 %v1071, 4294901760
    %v1281 = vsub.f32 %v1071, %v1280
    %v1282 = vand.u32 %v1281, 4294901760
    %1283 = vmatpush.msra.mxu0 %v1282
    %v1284 = vand.u32 %v1070, 4294901760
    %v1285 = vsub.f32 %v1070, %v1284
    %v1286 = vand.u32 %v1285, 4294901760
    %1287 = vmatpush.msra.mxu0 %v1286
    %v1288 = vand.u32 %v1083, 4294901760
    %1289 = vmatmul.f32.gmra.mxu0 %v1288
    %v1290 = vpop.f32.mrf.mxu0
    %v1291 = vadd.f32 %v1246, %v1290
    %1292 = vdwg.mxu0
    %1293 = vmatpush.msra.mxu0 0.0
    %1294 = vmatpush.msra.mxu0 0.0
    %1295 = vmatpush.msra.mxu0 0.0
    %1296 = vmatpush.msra.mxu0 0.0
    %1297 = vmatpush.msra.mxu0 0.0
    %1298 = vmatpush.msra.mxu0 0.0
    %1299 = vmatpush.msra.mxu0 0.0
    %1300 = vmatpush.msra.mxu0 0.0
    %v1301 = vand.u32 %v1077, 4294901760
    %1302 = vmatpush.msra.mxu0 %v1301
    %v1303 = vand.u32 %v1076, 4294901760
    %1304 = vmatpush.msra.mxu0 %v1303
    %v1305 = vand.u32 %v1075, 4294901760
    %1306 = vmatpush.msra.mxu0 %v1305
    %v1307 = vand.u32 %v1074, 4294901760
    %1308 = vmatpush.msra.mxu0 %v1307
    %v1309 = vand.u32 %v1073, 4294901760
    %1310 = vmatpush.msra.mxu0 %v1309
    %v1311 = vand.u32 %v1072, 4294901760
    %1312 = vmatpush.msra.mxu0 %v1311
    %v1313 = vand.u32 %v1071, 4294901760
    %1314 = vmatpush.msra.mxu0 %v1313
    %v1315 = vand.u32 %v1070, 4294901760
    %1316 = vmatpush.msra.mxu0 %v1315
    %v1317 = vand.u32 %v1083, 4294901760
    %1318 = vmatmul.f32.gmra.mxu0 %v1317
    %v1319 = vpop.f32.mrf.mxu0
    %v1320 = vadd.f32 %v1291, %v1319
    %1321 = vdwg.mxu0
    %1323 = vrot.lane.b32.xlu0 %v1320, 16
    %v1324 = vpop.permute.xlu0 %1323
    %v1326 = vsel %vm757, %v794, %v1324
    %vm1327 = vcmask 261120
    %1328 = vst.msk [vmem:[#allocation2] sm:$0xff] %vm1327, %v1326
    // Predicated region
    $region46: #{tpu_custom_call.1} parent=1 // pred_check
      _
    $region47: #{tpu_custom_call.1} parent=1 // pred_check_branch
      %1330 = sbr.rel (0) target = $region49
    $region48: #{tpu_custom_call.1} parent=1 // pred_region
      %1332 = vsyncadd [#allocation3], 0
      %s1334 = sshll.u32 [#allocation2], 4
      %s1335 = int_to_ptr.vmem [resolvable:$true] %s1334
      %s1336 = sshll.u32 %s11, 4
      %s1337 = int_to_ptr.hbm [resolvable:$true] %s1336
      %1339 = dma.vmem_to_hbm [thread:$0]  %s1335, 128, %s1337, [#allocation3]
    $region49: #{tpu_custom_call.1} parent=1 // pred_fallthru
      _
    // Predicated region
    $region50: #{tpu_custom_call.1} parent=1 // pred_check
      _
    $region51: #{tpu_custom_call.1} parent=1 // pred_check_branch
      %1341 = sbr.rel (0) target = $region53
    $region52: #{tpu_custom_call.1} parent=1 // pred_region
      %1343 = dma.done [#allocation3], 128
    $region53: #{tpu_custom_call.1} parent=1 // pred_fallthru
      _
    %1344 = vsyncpa [#allocation3], 1

</llo_original>
